<compile_context>
chip_gen: v6e
topology: v6e:2x2x1
jax: 0.10.0
libtpu: 0.0.40
codegen_flags: <defaults>
</compile_context>

<pallas_src>
import jax
import jax.numpy as jnp
from jax.experimental import pallas as pl
from jax.experimental.pallas import tpu as pltpu

# --- small synthetic config -------------------------------------------------
N_GRAPHS = 8      # total graphs in the batch
GROUP = 4         # graphs fused per grid step (4 -> EF=128 fills a v5e MXU pass;
                  # use 8 on v6e/v7x for EF=256)
N_NODES = 16      # nodes per graph
N_EDGES = 32      # edges per graph
HIDDEN = 32       # config.hidden_dim
H2 = HIDDEN // 2
NODE_CH = 8       # config.laplacian_eigenvector
NUM_CONVS = 2     # config.num_convs_local
NUM_BOND_TYPES = 100

LANE = 128        # TPU lane width: pad hidden / node-channel / vocab axes to it
HP = LANE         # padded hidden
CP = LANE         # padded node channels
VP = LANE         # padded bond vocabulary

# static indices into the stacked parameter refs
MAT_TABLE = 0
MAT_EW2 = 1
MAT_NW = 2
MAT_CW0 = 3                      # NUM_CONVS consecutive entries
MAT_GW1 = MAT_CW0 + NUM_CONVS
MAT_GW2 = MAT_GW1 + 1
MAT_GW3 = MAT_GW2 + 1
NMAT = MAT_GW3 + 1

B_EW1 = 0
B_EB1 = 1
B_EB2 = 2
B_NB = 3
B_CB0 = 4                        # NUM_CONVS consecutive entries
B_GB1 = B_CB0 + NUM_CONVS
B_GB2 = B_GB1 + 1
B_GB3 = B_GB2 + 1
NBIAS = B_GB3 + 1


# --- Pallas kernel: one fused group of GROUP graphs per grid step -------------
def edm_block_kernel(
    nz_ref,      # [1, NF, CP]  bf16  fused node features (zero-padded channels)
    se_ref,      # [1, EF, 2]   int32 columns: (src, edge_type), src offset per graph
    dst_ref,     # [1, 1, EF]   int32 edge destination (offset per graph)
    elen_ref,    # [1, EF, 1]   f32   edge lengths
    pos_ref,     # [1, NF, HP]  f32   positions zero-padded to lane width
    mats_ref,    # [NMAT, HP, HP] bf16  stacked MXU weight matrices (+ bond table)
    bias_ref,    # [NBIAS, 1, HP] f32   stacked biases (+ ew1 elementwise weight)
    out_ref,     # [1, NF, HP]  f32
):
    f32 = jnp.float32
    bf16 = jnp.bfloat16
    nf = nz_ref.shape[1]
    ef = se_ref.shape[1]
    vp = mats_ref.shape[1]   # == HP == VP

    se = se_ref[0]                                 # [EF, 2]
    src = se[:, 0:1]                               # [EF, 1]
    et = se[:, 1:2]                                # [EF, 1]
    dst = dst_ref[0]                               # [1, EF]

    # One-hot masks built in-register (exact in bf16); block-diagonal because the
    # wrapper already offset src/dst by (g % GROUP) * N_NODES.
    G = (jax.lax.broadcasted_iota(jnp.int32, (ef, nf), 1) == src).astype(bf16)        # [EF,NF]
    S = (jax.lax.broadcasted_iota(jnp.int32, (nf, ef), 0) == dst).astype(bf16)        # [NF,EF]
    bond_oh = (jax.lax.broadcasted_iota(jnp.int32, (ef, vp), 1) == et).astype(bf16)   # [EF,VP]

    # ---- edge_encoder_local: MLP(edge_length) * bond_embedding(edge_type) ----
    bond_emb = jnp.dot(bond_oh, mats_ref[MAT_TABLE], preferred_element_type=f32)      # [EF,HP]
    d = jnp.maximum(elen_ref[0] * bias_ref[B_EW1] + bias_ref[B_EB1], 0.0)             # Linear(1,H)
    d = jnp.dot(d.astype(bf16), mats_ref[MAT_EW2],
                preferred_element_type=f32) + bias_ref[B_EB2]
    edge_attr = d * bond_emb                                                          # [EF,HP]

    # ---- encoder_local: node embedding + GCN message passing ----
    x = jnp.dot(nz_ref[0], mats_ref[MAT_NW], preferred_element_type=f32) + bias_ref[B_NB]
    for l in range(NUM_CONVS):
        xj = jnp.dot(G, x.astype(bf16), preferred_element_type=f32)                   # gather x[src]
        msg = (xj * edge_attr).astype(bf16)                                           # edge-gated messages
        agg = jnp.dot(S, msg, preferred_element_type=f32)                             # scatter-add by dst
        h = jnp.dot((x + agg).astype(bf16), mats_ref[MAT_CW0 + l],
                    preferred_element_type=f32) + bias_ref[B_CB0 + l]
        x = jnp.maximum(h, 0.0) + x                                                   # residual short-cut

    # ---- grad_local_dist_mlp: H -> H -> H/2 -> 2 (all lane-padded to 128) ----
    h = jnp.maximum(jnp.dot(x.astype(bf16), mats_ref[MAT_GW1],
                            preferred_element_type=f32) + bias_ref[B_GB1], 0.0)
    h = jnp.maximum(jnp.dot(h.astype(bf16), mats_ref[MAT_GW2],
                            preferred_element_type=f32) + bias_ref[B_GB2], 0.0)
    node_pos = jnp.dot(h.astype(bf16), mats_ref[MAT_GW3],
                       preferred_element_type=f32) + bias_ref[B_GB3]

    # ---- pos = pos + node_pos (lane-dense slab; wrapper slices the 2 real cols)
    out_ref[0] = pos_ref[0] + node_pos


# --- parameter preparation: zero-pad, cast MXU operands to bf16, stack --------
def pad_params(params, bond_table):
    assert NUM_BOND_TYPES <= VP, "bond vocabulary must fit the padded table"
    assert VP == HP, "bond table shares the [HP,HP] matrix stack"
    assert NODE_CH <= CP and HIDDEN <= HP and H2 <= HP
    (ew1, eb1, ew2, eb2, nw, nb, cw, cb, gw1, gb1, gw2, gb2, gw3, gb3) = params
    bf16 = jnp.bfloat16

    def mat(w):   # pad a 2-D weight to [HP, HP], cast to bf16
        return jnp.pad(w, ((0, HP - w.shape[0]), (0, HP - w.shape[1]))).astype(bf16)

    def bias(v):  # pad a bias / elementwise weight to [1, HP], keep f32
        v = v.reshape(1, -1).astype(jnp.float32)
        return jnp.pad(v, ((0, 0), (0, HP - v.shape[1])))

    mats = jnp.stack(
        [mat(bond_table), mat(ew2), mat(nw)]
        + [mat(cw[l]) for l in range(NUM_CONVS)]
        + [mat(gw1), mat(gw2), mat(gw3)], axis=0)                     # [NMAT, HP, HP] bf16
    biases = jnp.stack(
        [bias(ew1), bias(eb1), bias(eb2), bias(nb)]
        + [bias(cb[l]) for l in range(NUM_CONVS)]
        + [bias(gb1), bias(gb2), bias(gb3)], axis=0)                  # [NBIAS, 1, HP] f32
    assert mats.shape[0] == NMAT and biases.shape[0] == NBIAS
    return mats, biases


# --- pallas_call plumbing ----------------------------------------------------
def _call_kernel(nz, se, dst, elen, pos_pad, mats, biases):
    ng, nf, _ = nz.shape
    ef = se.shape[1]

    def per_group(shape):
        return pl.BlockSpec(shape, lambda g: (g, 0, 0))

    def shared(arr):
        # Block index is constant across the grid -> weights stay resident in VMEM.
        return pl.BlockSpec(arr.shape, lambda g, _nd=arr.ndim: (0,) * _nd)

    in_specs = [
        per_group((1, nf, CP)),    # fused node features
        per_group((1, ef, 2)),     # (src, edge_type) columns
        per_group((1, 1, ef)),     # dst row
        per_group((1, ef, 1)),     # edge length column
        per_group((1, nf, HP)),    # padded pos
        shared(mats),
        shared(biases),
    ]

    return pl.pallas_call(
        edm_block_kernel,
        out_shape=jax.ShapeDtypeStruct((ng, nf, HP), jnp.float32),
        grid=(ng,),
        in_specs=in_specs,
        out_specs=per_group((1, nf, HP)),
        compiler_params=pltpu.CompilerParams(
            dimension_semantics=("parallel",),
            vmem_limit_bytes=32 * 1024 * 1024),   # explicit budget (v7x has 64 MiB VMEM)
    )(nz, se, dst, elen, pos_pad, mats, biases)


# --- wrapper mirroring EDM_Block.forward (batched over B stacked graphs) ------
def edm_block_forward(node_emb, node_type, node_degree, pos, edge_index,
                      edge_type, edge_length, batch, time_step, params, bond_table,
                      group=GROUP):
    # node_type / node_degree / batch / time_step are accepted but unused,
    # exactly as in the PyTorch forward.
    del node_type, node_degree, batch, time_step
    B, N, C = node_emb.shape
    E = edge_index.shape[-1]
    D = pos.shape[-1]
    assert B % group == 0, "pad the batch to a multiple of the fused group size"
    ng = B // group
    nf = group * N
    ef = group * E

    # Block-diagonal fusion: offset node indices by (g % group) * N so each
    # graph's edges only touch its own rows of the fused node matrix.
    offs = (jnp.arange(B, dtype=jnp.int32) % group) * N                 # [B]
    src = edge_index[:, 0, :].astype(jnp.int32) + offs[:, None]          # [B, E]
    dst = edge_index[:, 1, :].astype(jnp.int32) + offs[:, None]          # [B, E]
    et = edge_type.astype(jnp.int32)                                     # [B, E]

    se = jnp.stack([src.reshape(ng, ef), et.reshape(ng, ef)], axis=-1)   # [ng, ef, 2]
    dst_row = dst.reshape(ng, 1, ef)                                     # [ng, 1, ef]
    elen = edge_length.astype(jnp.float32).reshape(ng, ef, 1)            # [ng, ef, 1]
    nz = jnp.pad(node_emb, ((0, 0), (0, 0), (0, CP - C))
                 ).astype(jnp.bfloat16).reshape(ng, nf, CP)
    pos_pad = jnp.pad(pos.astype(jnp.float32),
                      ((0, 0), (0, 0), (0, HP - D))).reshape(ng, nf, HP)

    mats, biases = pad_params(params, bond_table)
    out_pad = _call_kernel(nz, se, dst_row, elen, pos_pad, mats, biases)
    return out_pad.reshape(B, N, HP)[..., :D]


# --- pure-JAX reference (f32, unpadded, per graph) for a correctness check ----
def edm_block_reference(node_z, edge_src, edge_dst, edge_type, edge_len, pos,
                        params, bond_table):
    (ew1, eb1, ew2, eb2, nw, nb, cw, cb, gw1, gb1, gw2, gb2, gw3, gb3) = params
    n = node_z.shape[0]
    bond_emb = bond_table[edge_type]                                   # [E, H]
    G = jax.nn.one_hot(edge_src, n, dtype=jnp.float32)                 # [E, N]
    S = jax.nn.one_hot(edge_dst, n, dtype=jnp.float32).T               # [N, E]
    d = jnp.maximum(edge_len * ew1 + eb1, 0.0)
    d = d @ ew2 + eb2
    edge_attr = d * bond_emb
    x = node_z @ nw + nb
    for l in range(NUM_CONVS):
        xj = G @ x
        agg = S @ (xj * edge_attr)
        h = jnp.maximum((x + agg) @ cw[l] + cb[l], 0.0)
        x = h + x
    h = jnp.maximum(x @ gw1 + gb1, 0.0)
    h = jnp.maximum(h @ gw2 + gb2, 0.0)
    return pos + (h @ gw3 + gb3)


def init_params(key):
    ks = jax.random.split(key, 16)
    s = 0.1      # node / conv scale
    se_ = 0.5    # edge-encoder scale (kept large so any graph-mixing bug is visible)
    sm = 0.2     # grad-MLP scale
    ew1 = se_ * jax.random.normal(ks[0], (1, HIDDEN), jnp.float32)
    eb1 = se_ * jax.random.normal(ks[1], (1, HIDDEN), jnp.float32)
    ew2 = se_ * jax.random.normal(ks[2], (HIDDEN, HIDDEN), jnp.float32)
    eb2 = se_ * jax.random.normal(ks[3], (1, HIDDEN), jnp.float32)
    nw = s * jax.random.normal(ks[4], (NODE_CH, HIDDEN), jnp.float32)
    nb = s * jax.random.normal(ks[5], (1, HIDDEN), jnp.float32)
    cw = s * jax.random.normal(ks[6], (NUM_CONVS, HIDDEN, HIDDEN), jnp.float32)
    cb = s * jax.random.normal(ks[7], (NUM_CONVS, 1, HIDDEN), jnp.float32)
    gw1 = sm * jax.random.normal(ks[8], (HIDDEN, HIDDEN), jnp.float32)
    gb1 = sm * jax.random.normal(ks[9], (1, HIDDEN), jnp.float32)
    gw2 = sm * jax.random.normal(ks[10], (HIDDEN, H2), jnp.float32)
    gb2 = sm * jax.random.normal(ks[11], (1, H2), jnp.float32)
    gw3 = sm * jax.random.normal(ks[12], (H2, 2), jnp.float32)
    gb3 = sm * jax.random.normal(ks[13], (1, 2), jnp.float32)
    bond_table = se_ * jax.random.normal(ks[14], (NUM_BOND_TYPES, HIDDEN), jnp.float32)
    params = (ew1, eb1, ew2, eb2, nw, nb, cw, cb, gw1, gb1, gw2, gb2, gw3, gb3)
    return params, bond_table


if __name__ == "__main__":
    key = jax.random.PRNGKey(0)
    k_in, k_par = jax.random.split(key)
    ki = jax.random.split(k_in, 8)

    B = N_GRAPHS
    # Inputs: a batch of B independent graphs (stacked, same N/E per graph).
    node_emb = jax.random.normal(ki[0], (B, N_NODES, NODE_CH), jnp.float32)    # z
    node_type = jax.random.randint(ki[1], (B, N_NODES), 0, 10)                 # unused
    node_degree = jax.random.randint(ki[2], (B, N_NODES), 1, 5)                # unused
    pos = jax.random.normal(ki[3], (B, N_NODES, 2), jnp.float32)
    edge_index = jax.random.randint(ki[4], (B, 2, N_EDGES), 0, N_NODES)
    edge_type = jax.random.randint(ki[5], (B, N_EDGES), 0, NUM_BOND_TYPES)
    edge_length = jax.random.uniform(ki[6], (B, N_EDGES, 1), jnp.float32, 0.5, 2.0)
    batch = jnp.zeros((B, N_NODES), jnp.int32)                                 # unused
    time_step = jnp.array([3], jnp.int32)                                      # unused

    params, bond_table = init_params(k_par)

    out = edm_block_forward(node_emb, node_type, node_degree, pos, edge_index,
                            edge_type, edge_length, batch, time_step,
                            params, bond_table)
    out = jax.block_until_ready(out)

    # correctness check against a pure-JAX f32 reference (per-graph, unfused)
    ref = jax.vmap(edm_block_reference,
                   in_axes=(0, 0, 0, 0, 0, 0, None, None))(
        node_emb, edge_index[:, 0], edge_index[:, 1], edge_type,
        edge_length, pos, params, bond_table)

    assert out.shape == (B, N_NODES, 2)
    assert jnp.allclose(out, ref, atol=2e-2, rtol=2e-2), "mismatch vs reference"

    print("KERNEL_OK")
</pallas_src>

<mosaic_0001>
module attributes {stable_mosaic.version = 11 : i64} {
  func.func @edm_block_kernel(%arg0: i32, %arg1: memref<1x64x128xbf16, #tpu.memory_space<vmem>>, %arg2: memref<1x128x2xi32, #tpu.memory_space<vmem>>, %arg3: memref<1x1x128xi32, #tpu.memory_space<vmem>>, %arg4: memref<1x128x1xf32, #tpu.memory_space<vmem>>, %arg5: memref<1x64x128xf32, #tpu.memory_space<vmem>>, %arg6: memref<8x128x128xbf16, #tpu.memory_space<vmem>>, %arg7: memref<9x1x128xf32, #tpu.memory_space<vmem>>, %arg8: memref<1x64x128xf32, #tpu.memory_space<vmem>>) attributes {dimension_semantics = [#tpu.dimension_semantics<parallel>], iteration_bounds = array<i64: 2>, scalar_prefetch = 0 : i64, scratch_operands = 0 : i64, tpu.core_type = #tpu.core_type<tc>, window_params = [{transform_indices = @transform_0, window_bounds = array<i64: 1, 64, 128>}, {transform_indices = @transform_1, window_bounds = array<i64: 1, 128, 2>}, {transform_indices = @transform_2, window_bounds = array<i64: 1, 1, 128>}, {transform_indices = @transform_3, window_bounds = array<i64: 1, 128, 1>}, {transform_indices = @transform_4, window_bounds = array<i64: 1, 64, 128>}, {pipeline_mode = #tpu.pipeline_mode<synchronous>, transform_indices = @transform_5, window_bounds = array<i64: 8, 128, 128>}, {pipeline_mode = #tpu.pipeline_mode<synchronous>, transform_indices = @transform_6, window_bounds = array<i64: 9, 1, 128>}, {transform_indices = @transform_7, window_bounds = array<i64: 1, 64, 128>}]} {
    %c0 = arith.constant 0 : index
    %c0_0 = arith.constant 0 : index
    %c0_1 = arith.constant 0 : index
    %0 = vector.load %arg2[%c0, %c0_0, %c0_1] : memref<1x128x2xi32, #tpu.memory_space<vmem>>, vector<1x128x2xi32>
    %1 = vector.shape_cast %0 : vector<1x128x2xi32> to vector<128x2xi32>
    %2 = vector.extract_strided_slice %1 {offsets = [0, 0], sizes = [128, 1], strides = [1, 1]} : vector<128x2xi32> to vector<128x1xi32>
    %3 = vector.extract_strided_slice %1 {offsets = [0, 1], sizes = [128, 1], strides = [1, 1]} : vector<128x2xi32> to vector<128x1xi32>
    %c0_2 = arith.constant 0 : index
    %c0_3 = arith.constant 0 : index
    %c0_4 = arith.constant 0 : index
    %4 = vector.load %arg3[%c0_2, %c0_3, %c0_4] : memref<1x1x128xi32, #tpu.memory_space<vmem>>, vector<1x1x128xi32>
    %5 = vector.shape_cast %4 : vector<1x1x128xi32> to vector<1x128xi32>
    %6 = tpu.iota {dimensions = array<i32: 1>} : vector<128x64xi32>
    %7 = vector.broadcast %2 : vector<128x1xi32> to vector<128x64xi32>
    %8 = arith.cmpi eq, %6, %7 : vector<128x64xi32>
    %9 = arith.extui %8 : vector<128x64xi1> to vector<128x64xi32>
    %10 = arith.sitofp %9 : vector<128x64xi32> to vector<128x64xf32>
    %11 = arith.truncf %10 : vector<128x64xf32> to vector<128x64xbf16>
    %12 = tpu.iota {dimensions = array<i32: 0>} : vector<64x128xi32>
    %13 = vector.broadcast %5 : vector<1x128xi32> to vector<64x128xi32>
    %14 = arith.cmpi eq, %12, %13 : vector<64x128xi32>
    %15 = arith.extui %14 : vector<64x128xi1> to vector<64x128xi32>
    %16 = arith.sitofp %15 : vector<64x128xi32> to vector<64x128xf32>
    %17 = arith.truncf %16 : vector<64x128xf32> to vector<64x128xbf16>
    %18 = tpu.iota {dimensions = array<i32: 1>} : vector<128x128xi32>
    %19 = vector.broadcast %3 : vector<128x1xi32> to vector<128x128xi32>
    %20 = arith.cmpi eq, %18, %19 : vector<128x128xi32>
    %21 = arith.extui %20 : vector<128x128xi1> to vector<128x128xi32>
    %22 = arith.sitofp %21 : vector<128x128xi32> to vector<128x128xf32>
    %23 = arith.truncf %22 : vector<128x128xf32> to vector<128x128xbf16>
    %c0_5 = arith.constant 0 : index
    %c0_6 = arith.constant 0 : index
    %c0_7 = arith.constant 0 : index
    %24 = vector.load %arg6[%c0_5, %c0_6, %c0_7] : memref<8x128x128xbf16, #tpu.memory_space<vmem>>, vector<1x128x128xbf16>
    %25 = vector.shape_cast %24 : vector<1x128x128xbf16> to vector<128x128xbf16>
    %cst = arith.constant dense<0.000000e+00> : vector<128x128xf32>
    %26 = tpu.matmul %23, %25, %cst {dimension_numbers = #tpu.dot_dimension_numbers<[1], [0], [0], [1], [0, 0, 1, 1], [], []>} : vector<128x128xbf16>, vector<128x128xbf16>, vector<128x128xf32> -> vector<128x128xf32>
    %c0_8 = arith.constant 0 : index
    %c0_9 = arith.constant 0 : index
    %c0_10 = arith.constant 0 : index
    %27 = vector.load %arg4[%c0_8, %c0_9, %c0_10] : memref<1x128x1xf32, #tpu.memory_space<vmem>>, vector<1x128x1xf32>
    %28 = vector.shape_cast %27 : vector<1x128x1xf32> to vector<128x1xf32>
    %c0_11 = arith.constant 0 : index
    %c0_12 = arith.constant 0 : index
    %c0_13 = arith.constant 0 : index
    %29 = vector.load %arg7[%c0_11, %c0_12, %c0_13] : memref<9x1x128xf32, #tpu.memory_space<vmem>>, vector<1x1x128xf32>
    %30 = vector.shape_cast %29 : vector<1x1x128xf32> to vector<1x128xf32>
    %31 = vector.broadcast %28 : vector<128x1xf32> to vector<128x128xf32>
    %32 = vector.broadcast %30 : vector<1x128xf32> to vector<128x128xf32>
    %33 = arith.mulf %31, %32 : vector<128x128xf32>
    %c1 = arith.constant 1 : index
    %c0_14 = arith.constant 0 : index
    %c0_15 = arith.constant 0 : index
    %34 = vector.load %arg7[%c1, %c0_14, %c0_15] : memref<9x1x128xf32, #tpu.memory_space<vmem>>, vector<1x1x128xf32>
    %35 = vector.shape_cast %34 : vector<1x1x128xf32> to vector<1x128xf32>
    %36 = vector.broadcast %35 : vector<1x128xf32> to vector<128x128xf32>
    %37 = arith.addf %33, %36 : vector<128x128xf32>
    %cst_16 = arith.constant 0.000000e+00 : f32
    %38 = vector.broadcast %cst_16 : f32 to vector<128x128xf32>
    %39 = arith.maximumf %37, %38 : vector<128x128xf32>
    %40 = arith.truncf %39 : vector<128x128xf32> to vector<128x128xbf16>
    %c1_17 = arith.constant 1 : index
    %c0_18 = arith.constant 0 : index
    %c0_19 = arith.constant 0 : index
    %41 = vector.load %arg6[%c1_17, %c0_18, %c0_19] : memref<8x128x128xbf16, #tpu.memory_space<vmem>>, vector<1x128x128xbf16>
    %42 = vector.shape_cast %41 : vector<1x128x128xbf16> to vector<128x128xbf16>
    %cst_20 = arith.constant dense<0.000000e+00> : vector<128x128xf32>
    %43 = tpu.matmul %40, %42, %cst_20 {dimension_numbers = #tpu.dot_dimension_numbers<[1], [0], [0], [1], [0, 0, 1, 1], [], []>} : vector<128x128xbf16>, vector<128x128xbf16>, vector<128x128xf32> -> vector<128x128xf32>
    %c2 = arith.constant 2 : index
    %c0_21 = arith.constant 0 : index
    %c0_22 = arith.constant 0 : index
    %44 = vector.load %arg7[%c2, %c0_21, %c0_22] : memref<9x1x128xf32, #tpu.memory_space<vmem>>, vector<1x1x128xf32>
    %45 = vector.shape_cast %44 : vector<1x1x128xf32> to vector<1x128xf32>
    %46 = vector.broadcast %45 : vector<1x128xf32> to vector<128x128xf32>
    %47 = arith.addf %43, %46 : vector<128x128xf32>
    %48 = arith.mulf %47, %26 : vector<128x128xf32>
    %c0_23 = arith.constant 0 : index
    %c0_24 = arith.constant 0 : index
    %c0_25 = arith.constant 0 : index
    %49 = vector.load %arg1[%c0_23, %c0_24, %c0_25] : memref<1x64x128xbf16, #tpu.memory_space<vmem>>, vector<1x64x128xbf16>
    %50 = vector.shape_cast %49 : vector<1x64x128xbf16> to vector<64x128xbf16>
    %c2_26 = arith.constant 2 : index
    %c0_27 = arith.constant 0 : index
    %c0_28 = arith.constant 0 : index
    %51 = vector.load %arg6[%c2_26, %c0_27, %c0_28] : memref<8x128x128xbf16, #tpu.memory_space<vmem>>, vector<1x128x128xbf16>
    %52 = vector.shape_cast %51 : vector<1x128x128xbf16> to vector<128x128xbf16>
    %cst_29 = arith.constant dense<0.000000e+00> : vector<64x128xf32>
    %53 = tpu.matmul %50, %52, %cst_29 {dimension_numbers = #tpu.dot_dimension_numbers<[1], [0], [0], [1], [0, 0, 1, 1], [], []>} : vector<64x128xbf16>, vector<128x128xbf16>, vector<64x128xf32> -> vector<64x128xf32>
    %c3 = arith.constant 3 : index
    %c0_30 = arith.constant 0 : index
    %c0_31 = arith.constant 0 : index
    %54 = vector.load %arg7[%c3, %c0_30, %c0_31] : memref<9x1x128xf32, #tpu.memory_space<vmem>>, vector<1x1x128xf32>
    %55 = vector.shape_cast %54 : vector<1x1x128xf32> to vector<1x128xf32>
    %56 = vector.broadcast %55 : vector<1x128xf32> to vector<64x128xf32>
    %57 = arith.addf %53, %56 : vector<64x128xf32>
    %58 = arith.truncf %57 : vector<64x128xf32> to vector<64x128xbf16>
    %cst_32 = arith.constant dense<0.000000e+00> : vector<128x128xf32>
    %59 = tpu.matmul %11, %58, %cst_32 {dimension_numbers = #tpu.dot_dimension_numbers<[1], [0], [0], [1], [0, 0, 1, 1], [], []>} : vector<128x64xbf16>, vector<64x128xbf16>, vector<128x128xf32> -> vector<128x128xf32>
    %60 = arith.mulf %59, %48 : vector<128x128xf32>
    %61 = arith.truncf %60 : vector<128x128xf32> to vector<128x128xbf16>
    %cst_33 = arith.constant dense<0.000000e+00> : vector<64x128xf32>
    %62 = tpu.matmul %17, %61, %cst_33 {dimension_numbers = #tpu.dot_dimension_numbers<[1], [0], [0], [1], [0, 0, 1, 1], [], []>} : vector<64x128xbf16>, vector<128x128xbf16>, vector<64x128xf32> -> vector<64x128xf32>
    %63 = arith.addf %57, %62 : vector<64x128xf32>
    %64 = arith.truncf %63 : vector<64x128xf32> to vector<64x128xbf16>
    %c3_34 = arith.constant 3 : index
    %c0_35 = arith.constant 0 : index
    %c0_36 = arith.constant 0 : index
    %65 = vector.load %arg6[%c3_34, %c0_35, %c0_36] : memref<8x128x128xbf16, #tpu.memory_space<vmem>>, vector<1x128x128xbf16>
    %66 = vector.shape_cast %65 : vector<1x128x128xbf16> to vector<128x128xbf16>
    %cst_37 = arith.constant dense<0.000000e+00> : vector<64x128xf32>
    %67 = tpu.matmul %64, %66, %cst_37 {dimension_numbers = #tpu.dot_dimension_numbers<[1], [0], [0], [1], [0, 0, 1, 1], [], []>} : vector<64x128xbf16>, vector<128x128xbf16>, vector<64x128xf32> -> vector<64x128xf32>
    %c4 = arith.constant 4 : index
    %c0_38 = arith.constant 0 : index
    %c0_39 = arith.constant 0 : index
    %68 = vector.load %arg7[%c4, %c0_38, %c0_39] : memref<9x1x128xf32, #tpu.memory_space<vmem>>, vector<1x1x128xf32>
    %69 = vector.shape_cast %68 : vector<1x1x128xf32> to vector<1x128xf32>
    %70 = vector.broadcast %69 : vector<1x128xf32> to vector<64x128xf32>
    %71 = arith.addf %67, %70 : vector<64x128xf32>
    %cst_40 = arith.constant 0.000000e+00 : f32
    %72 = vector.broadcast %cst_40 : f32 to vector<64x128xf32>
    %73 = arith.maximumf %71, %72 : vector<64x128xf32>
    %74 = arith.addf %73, %57 : vector<64x128xf32>
    %75 = arith.truncf %74 : vector<64x128xf32> to vector<64x128xbf16>
    %cst_41 = arith.constant dense<0.000000e+00> : vector<128x128xf32>
    %76 = tpu.matmul %11, %75, %cst_41 {dimension_numbers = #tpu.dot_dimension_numbers<[1], [0], [0], [1], [0, 0, 1, 1], [], []>} : vector<128x64xbf16>, vector<64x128xbf16>, vector<128x128xf32> -> vector<128x128xf32>
    %77 = arith.mulf %76, %48 : vector<128x128xf32>
    %78 = arith.truncf %77 : vector<128x128xf32> to vector<128x128xbf16>
    %cst_42 = arith.constant dense<0.000000e+00> : vector<64x128xf32>
    %79 = tpu.matmul %17, %78, %cst_42 {dimension_numbers = #tpu.dot_dimension_numbers<[1], [0], [0], [1], [0, 0, 1, 1], [], []>} : vector<64x128xbf16>, vector<128x128xbf16>, vector<64x128xf32> -> vector<64x128xf32>
    %80 = arith.addf %74, %79 : vector<64x128xf32>
    %81 = arith.truncf %80 : vector<64x128xf32> to vector<64x128xbf16>
    %c4_43 = arith.constant 4 : index
    %c0_44 = arith.constant 0 : index
    %c0_45 = arith.constant 0 : index
    %82 = vector.load %arg6[%c4_43, %c0_44, %c0_45] : memref<8x128x128xbf16, #tpu.memory_space<vmem>>, vector<1x128x128xbf16>
    %83 = vector.shape_cast %82 : vector<1x128x128xbf16> to vector<128x128xbf16>
    %cst_46 = arith.constant dense<0.000000e+00> : vector<64x128xf32>
    %84 = tpu.matmul %81, %83, %cst_46 {dimension_numbers = #tpu.dot_dimension_numbers<[1], [0], [0], [1], [0, 0, 1, 1], [], []>} : vector<64x128xbf16>, vector<128x128xbf16>, vector<64x128xf32> -> vector<64x128xf32>
    %c5 = arith.constant 5 : index
    %c0_47 = arith.constant 0 : index
    %c0_48 = arith.constant 0 : index
    %85 = vector.load %arg7[%c5, %c0_47, %c0_48] : memref<9x1x128xf32, #tpu.memory_space<vmem>>, vector<1x1x128xf32>
    %86 = vector.shape_cast %85 : vector<1x1x128xf32> to vector<1x128xf32>
    %87 = vector.broadcast %86 : vector<1x128xf32> to vector<64x128xf32>
    %88 = arith.addf %84, %87 : vector<64x128xf32>
    %cst_49 = arith.constant 0.000000e+00 : f32
    %89 = vector.broadcast %cst_49 : f32 to vector<64x128xf32>
    %90 = arith.maximumf %88, %89 : vector<64x128xf32>
    %91 = arith.addf %90, %74 : vector<64x128xf32>
    %92 = arith.truncf %91 : vector<64x128xf32> to vector<64x128xbf16>
    %c5_50 = arith.constant 5 : index
    %c0_51 = arith.constant 0 : index
    %c0_52 = arith.constant 0 : index
    %93 = vector.load %arg6[%c5_50, %c0_51, %c0_52] : memref<8x128x128xbf16, #tpu.memory_space<vmem>>, vector<1x128x128xbf16>
    %94 = vector.shape_cast %93 : vector<1x128x128xbf16> to vector<128x128xbf16>
    %cst_53 = arith.constant dense<0.000000e+00> : vector<64x128xf32>
    %95 = tpu.matmul %92, %94, %cst_53 {dimension_numbers = #tpu.dot_dimension_numbers<[1], [0], [0], [1], [0, 0, 1, 1], [], []>} : vector<64x128xbf16>, vector<128x128xbf16>, vector<64x128xf32> -> vector<64x128xf32>
    %c6 = arith.constant 6 : index
    %c0_54 = arith.constant 0 : index
    %c0_55 = arith.constant 0 : index
    %96 = vector.load %arg7[%c6, %c0_54, %c0_55] : memref<9x1x128xf32, #tpu.memory_space<vmem>>, vector<1x1x128xf32>
    %97 = vector.shape_cast %96 : vector<1x1x128xf32> to vector<1x128xf32>
    %98 = vector.broadcast %97 : vector<1x128xf32> to vector<64x128xf32>
    %99 = arith.addf %95, %98 : vector<64x128xf32>
    %cst_56 = arith.constant 0.000000e+00 : f32
    %100 = vector.broadcast %cst_56 : f32 to vector<64x128xf32>
    %101 = arith.maximumf %99, %100 : vector<64x128xf32>
    %102 = arith.truncf %101 : vector<64x128xf32> to vector<64x128xbf16>
    %c6_57 = arith.constant 6 : index
    %c0_58 = arith.constant 0 : index
    %c0_59 = arith.constant 0 : index
    %103 = vector.load %arg6[%c6_57, %c0_58, %c0_59] : memref<8x128x128xbf16, #tpu.memory_space<vmem>>, vector<1x128x128xbf16>
    %104 = vector.shape_cast %103 : vector<1x128x128xbf16> to vector<128x128xbf16>
    %cst_60 = arith.constant dense<0.000000e+00> : vector<64x128xf32>
    %105 = tpu.matmul %102, %104, %cst_60 {dimension_numbers = #tpu.dot_dimension_numbers<[1], [0], [0], [1], [0, 0, 1, 1], [], []>} : vector<64x128xbf16>, vector<128x128xbf16>, vector<64x128xf32> -> vector<64x128xf32>
    %c7 = arith.constant 7 : index
    %c0_61 = arith.constant 0 : index
    %c0_62 = arith.constant 0 : index
    %106 = vector.load %arg7[%c7, %c0_61, %c0_62] : memref<9x1x128xf32, #tpu.memory_space<vmem>>, vector<1x1x128xf32>
    %107 = vector.shape_cast %106 : vector<1x1x128xf32> to vector<1x128xf32>
    %108 = vector.broadcast %107 : vector<1x128xf32> to vector<64x128xf32>
    %109 = arith.addf %105, %108 : vector<64x128xf32>
    %cst_63 = arith.constant 0.000000e+00 : f32
    %110 = vector.broadcast %cst_63 : f32 to vector<64x128xf32>
    %111 = arith.maximumf %109, %110 : vector<64x128xf32>
    %112 = arith.truncf %111 : vector<64x128xf32> to vector<64x128xbf16>
    %c7_64 = arith.constant 7 : index
    %c0_65 = arith.constant 0 : index
    %c0_66 = arith.constant 0 : index
    %113 = vector.load %arg6[%c7_64, %c0_65, %c0_66] : memref<8x128x128xbf16, #tpu.memory_space<vmem>>, vector<1x128x128xbf16>
    %114 = vector.shape_cast %113 : vector<1x128x128xbf16> to vector<128x128xbf16>
    %cst_67 = arith.constant dense<0.000000e+00> : vector<64x128xf32>
    %115 = tpu.matmul %112, %114, %cst_67 {dimension_numbers = #tpu.dot_dimension_numbers<[1], [0], [0], [1], [0, 0, 1, 1], [], []>} : vector<64x128xbf16>, vector<128x128xbf16>, vector<64x128xf32> -> vector<64x128xf32>
    %c8 = arith.constant 8 : index
    %c0_68 = arith.constant 0 : index
    %c0_69 = arith.constant 0 : index
    %116 = vector.load %arg7[%c8, %c0_68, %c0_69] : memref<9x1x128xf32, #tpu.memory_space<vmem>>, vector<1x1x128xf32>
    %117 = vector.shape_cast %116 : vector<1x1x128xf32> to vector<1x128xf32>
    %118 = vector.broadcast %117 : vector<1x128xf32> to vector<64x128xf32>
    %119 = arith.addf %115, %118 : vector<64x128xf32>
    %c0_70 = arith.constant 0 : index
    %c0_71 = arith.constant 0 : index
    %c0_72 = arith.constant 0 : index
    %120 = vector.load %arg5[%c0_70, %c0_71, %c0_72] : memref<1x64x128xf32, #tpu.memory_space<vmem>>, vector<1x64x128xf32>
    %121 = vector.shape_cast %120 : vector<1x64x128xf32> to vector<64x128xf32>
    %122 = arith.addf %121, %119 : vector<64x128xf32>
    %c0_73 = arith.constant 0 : index
    %c0_74 = arith.constant 0 : index
    %c0_75 = arith.constant 0 : index
    %123 = vector.load %arg8[%c0_73, %c0_74, %c0_75] : memref<1x64x128xf32, #tpu.memory_space<vmem>>, vector<1x64x128xf32>
    %124 = vector.shape_cast %123 : vector<1x64x128xf32> to vector<64x128xf32>
    %125 = vector.shape_cast %122 : vector<64x128xf32> to vector<1x64x128xf32>
    tpu.vector_store %arg8[%c0_73, %c0_74, %c0_75], %125 {strides = array<i32>} : memref<1x64x128xf32, #tpu.memory_space<vmem>>, vector<1x64x128xf32>,
    return
  }
  func.func @transform_0(%arg0: i32) -> (i32, i32, i32) {
    %c0_i32 = arith.constant 0 : i32
    %c0_i32_0 = arith.constant 0 : i32
    %c0_i32_1 = arith.constant 0 : i32
    return %arg0, %c0_i32, %c0_i32_0 : i32, i32, i32
  }
  func.func @transform_1(%arg0: i32) -> (i32, i32, i32) {
    %c0_i32 = arith.constant 0 : i32
    %c0_i32_0 = arith.constant 0 : i32
    %c0_i32_1 = arith.constant 0 : i32
    return %arg0, %c0_i32, %c0_i32_0 : i32, i32, i32
  }
  func.func @transform_2(%arg0: i32) -> (i32, i32, i32) {
    %c0_i32 = arith.constant 0 : i32
    %c0_i32_0 = arith.constant 0 : i32
    %c0_i32_1 = arith.constant 0 : i32
    return %arg0, %c0_i32, %c0_i32_0 : i32, i32, i32
  }
  func.func @transform_3(%arg0: i32) -> (i32, i32, i32) {
    %c0_i32 = arith.constant 0 : i32
    %c0_i32_0 = arith.constant 0 : i32
    %c0_i32_1 = arith.constant 0 : i32
    return %arg0, %c0_i32, %c0_i32_0 : i32, i32, i32
  }
  func.func @transform_4(%arg0: i32) -> (i32, i32, i32) {
    %c0_i32 = arith.constant 0 : i32
    %c0_i32_0 = arith.constant 0 : i32
    %c0_i32_1 = arith.constant 0 : i32
    return %arg0, %c0_i32, %c0_i32_0 : i32, i32, i32
  }
  func.func @transform_5(%arg0: i32) -> (i32, i32, i32) {
    %c0_i32 = arith.constant 0 : i32
    %c0_i32_0 = arith.constant 0 : i32
    %c0_i32_1 = arith.constant 0 : i32
    %c0_i32_2 = arith.constant 0 : i32
    return %c0_i32, %c0_i32_0, %c0_i32_1 : i32, i32, i32
  }
  func.func @transform_6(%arg0: i32) -> (i32, i32, i32) {
    %c0_i32 = arith.constant 0 : i32
    %c0_i32_0 = arith.constant 0 : i32
    %c0_i32_1 = arith.constant 0 : i32
    %c0_i32_2 = arith.constant 0 : i32
    return %c0_i32, %c0_i32_0, %c0_i32_1 : i32, i32, i32
  }
  func.func @transform_7(%arg0: i32) -> (i32, i32, i32) {
    %c0_i32 = arith.constant 0 : i32
    %c0_i32_0 = arith.constant 0 : i32
    %c0_i32_1 = arith.constant 0 : i32
    return %arg0, %c0_i32, %c0_i32_0 : i32, i32, i32
  }
}

</mosaic_0001>

<llo_original>
// kernel: tpu_custom_call.1
$region0: #{tpu_custom_call.1}
  #allocation0 [shape = 'u32[]', space=smem, size = 0x4, offset = 0x4, fixed_abs, tag = 'smem constant byte address 0x4 - core index']
  #allocation1 [shape = 'u32[144,128]{1,0:T(1,128)}', space=vmem, size = 0x12000, scoped, tag = 'internal scratch']
  %s0 = inlined_call_operand.hbm [shape: bf16[2,64,128], index: 0, kind: input, shape index: {}]
  %s1 = inlined_call_operand.vmem [shape: s32[2,128,2], index: 1, kind: input, shape index: {}]
  %s2 = inlined_call_operand.vmem [shape: s32[2,1,128], index: 2, kind: input, shape index: {}]
  %s3 = inlined_call_operand.vmem [shape: f32[2,128,1], index: 3, kind: input, shape index: {}]
  %s4 = inlined_call_operand.hbm [shape: f32[2,64,128], index: 4, kind: input, shape index: {}]
  %s5 = inlined_call_operand.vmem [shape: bf16[8,128,128], index: 5, kind: input, shape index: {}]
  %s6 = inlined_call_operand.vmem [shape: f32[9,1,128], index: 6, kind: input, shape index: {}]
  %s7 = inlined_call_operand.hbm [shape: f32[2,64,128], index: 7, kind: output, shape index: {}]
  %s8 = sld [smem:[#allocation0]]
  $region69: #{tpu_custom_call.1} parent=0
    _
  %s10 = ssub.s32 1, %s8
  %s11 = scalar_select 0, %s10, %s8
  $region1: #{tpu_custom_call.1} parent=0
    #allocation2 [shape = 'u8[32768]{0}', space=vmem, size = 0x8000, scoped, tag = 'input window, operand 0']
    #allocation3 [shape = 's32[2]{0}', space=sflag, size = 0x8, scoped, tag = 'scoped memory for tpu_custom_call.1']
    #allocation4 [shape = 's32[2]{0}', space=sflag, size = 0x8, scoped, tag = 'scoped memory for tpu_custom_call.1']
    #allocation5 [shape = 'u8[65536]{0}', space=vmem, size = 0x10000, scoped, tag = 'input window, operand 4']
    #allocation6 [shape = 's32[2]{0}', space=sflag, size = 0x8, scoped, tag = 'scoped memory for tpu_custom_call.1']
    #allocation7 [shape = 'u8[65536]{0}', space=vmem, size = 0x10000, scoped, tag = 'output window, operand 0']
    %12 = vsyncpa [#allocation3], 0
    %s13 = scalar_lea.sflag [#allocation3], 1
    %14 = vsyncpa %s13, 0
    %15 = vsyncpa [#allocation6], 0
    %s16 = scalar_lea.sflag [#allocation6], 1
    %17 = vsyncpa %s16, 0
    %18 = vsyncpa [#allocation4], 0
    %s19 = scalar_lea.sflag [#allocation4], 1
    %20 = vsyncpa %s19, 0
    loop: start=0, step=1, limit=4
    $region2: #{tpu_custom_call.1} parent=1 // loop_pre_header
      _
    $region3: #{tpu_custom_call.1} parent=1 // loop_header
      %s22 = sphi 0, %s26
      %p23 = scmp.ge.s32.totalorder %s22, 4
      %s32 = sphi 0, %s34
      %s35 = sphi 0, %s32
      %s36 = sphi 0, %s35
      %s52 = sphi 0, %s36
      %s58 = sphi 0, %s60
      %s61 = sphi 0, %s58
      %s62 = sphi 0, %s61
      %s78 = sphi 0, %s62
      %s84 = sphi 0, %s86
      %s87 = sphi 0, %s84
      %s88 = sphi 0, %s87
      %s104 = sphi 0, %s88
      %s110 = sphi 0, %s112
      %s113 = sphi 0, %s110
      %s114 = sphi 0, %s113
      %s130 = sphi 0, %s114
      %s136 = sphi 0, %s138
      %s139 = sphi 0, %s136
      %s140 = sphi 0, %s139
      %s156 = sphi 0, %s140
      %s160 = sphi 0, %s160
      %s162 = sphi 0, %s160
      %s163 = sphi 0, %s162
      %s177 = sphi 0, %s163
      %s181 = sphi 0, %s181
      %s183 = sphi 0, %s181
      %s184 = sphi 0, %s183
      %s198 = sphi 0, %s184
      %s204 = sphi 0, %s206
      %s207 = sphi 0, %s204
      %s208 = sphi 0, %s207
      %s224 = sphi 0, %s208
    $region4: #{tpu_custom_call.1} parent=1 // loop_header_branch
      %25 = sbr.rel (%p23) target = $region8
    $region5: #{tpu_custom_call.1} parent=1 // loop_body
      %s27 = ssub.s32 %s22, 1
      %s28 = ssub.s32 %s22, 2
      %s29 = sadd.s32 %s22, 1
      %s30 = ssub.s32 %s22, %s29
      %p31 = scmp.eq.s32.totalorder %s30, 0
      %s33 = sadd.s32 %s32, 1
      %s34 = scalar_select %p31, %s32, %s33
      %p37 = pneg %p31
      %p38 = scmp.eq.s32.totalorder %s22, 1
      %p39 = por %p37, %p38
      %p40 = scmp.ne.s32.totalorder %s32, %s35
      %p41 = scmp.eq.s32.totalorder %s22, 0
      %p42 = por %p40, %p41
      %p43 = scmp.ne.s32.totalorder %s32, %s35
      %p44 = scmp.eq.s32.totalorder %s27, 1
      %p45 = por %p43, %p44
      %p46 = scmp.ne.s32.totalorder %s35, %s36
      %p47 = scmp.eq.s32.totalorder %s27, 0
      %p48 = por %p46, %p47
      %p49 = scmp.ne.s32.totalorder %s35, %s36
      %p50 = scmp.eq.s32.totalorder %s28, 1
      %p51 = por %p49, %p50
      %p53 = scmp.ne.s32.totalorder %s36, %s52
      %p54 = scmp.eq.s32.totalorder %s28, 0
      %p55 = por %p53, %p54
      %s56 = ssub.s32 %s22, %s29
      %p57 = scmp.eq.s32.totalorder %s56, 0
      %s59 = sadd.s32 %s58, 1
      %s60 = scalar_select %p57, %s58, %s59
      %p63 = pneg %p57
      %p64 = scmp.eq.s32.totalorder %s22, 1
      %p65 = por %p63, %p64
      %p66 = scmp.ne.s32.totalorder %s58, %s61
      %p67 = scmp.eq.s32.totalorder %s22, 0
      %p68 = por %p66, %p67
      %p69 = scmp.ne.s32.totalorder %s58, %s61
      %p70 = scmp.eq.s32.totalorder %s27, 1
      %p71 = por %p69, %p70
      %p72 = scmp.ne.s32.totalorder %s61, %s62
      %p73 = scmp.eq.s32.totalorder %s27, 0
      %p74 = por %p72, %p73
      %p75 = scmp.ne.s32.totalorder %s61, %s62
      %p76 = scmp.eq.s32.totalorder %s28, 1
      %p77 = por %p75, %p76
      %p79 = scmp.ne.s32.totalorder %s62, %s78
      %p80 = scmp.eq.s32.totalorder %s28, 0
      %p81 = por %p79, %p80
      %s82 = ssub.s32 %s22, %s29
      %p83 = scmp.eq.s32.totalorder %s82, 0
      %s85 = sadd.s32 %s84, 1
      %s86 = scalar_select %p83, %s84, %s85
      %p89 = pneg %p83
      %p90 = scmp.eq.s32.totalorder %s22, 1
      %p91 = por %p89, %p90
      %p92 = scmp.ne.s32.totalorder %s84, %s87
      %p93 = scmp.eq.s32.totalorder %s22, 0
      %p94 = por %p92, %p93
      %p95 = scmp.ne.s32.totalorder %s84, %s87
      %p96 = scmp.eq.s32.totalorder %s27, 1
      %p97 = por %p95, %p96
      %p98 = scmp.ne.s32.totalorder %s87, %s88
      %p99 = scmp.eq.s32.totalorder %s27, 0
      %p100 = por %p98, %p99
      %p101 = scmp.ne.s32.totalorder %s87, %s88
      %p102 = scmp.eq.s32.totalorder %s28, 1
      %p103 = por %p101, %p102
      %p105 = scmp.ne.s32.totalorder %s88, %s104
      %p106 = scmp.eq.s32.totalorder %s28, 0
      %p107 = por %p105, %p106
      %s108 = ssub.s32 %s22, %s29
      %p109 = scmp.eq.s32.totalorder %s108, 0
      %s111 = sadd.s32 %s110, 1
      %s112 = scalar_select %p109, %s110, %s111
      %p115 = pneg %p109
      %p116 = scmp.eq.s32.totalorder %s22, 1
      %p117 = por %p115, %p116
      %p118 = scmp.ne.s32.totalorder %s110, %s113
      %p119 = scmp.eq.s32.totalorder %s22, 0
      %p120 = por %p118, %p119
      %p121 = scmp.ne.s32.totalorder %s110, %s113
      %p122 = scmp.eq.s32.totalorder %s27, 1
      %p123 = por %p121, %p122
      %p124 = scmp.ne.s32.totalorder %s113, %s114
      %p125 = scmp.eq.s32.totalorder %s27, 0
      %p126 = por %p124, %p125
      %p127 = scmp.ne.s32.totalorder %s113, %s114
      %p128 = scmp.eq.s32.totalorder %s28, 1
      %p129 = por %p127, %p128
      %p131 = scmp.ne.s32.totalorder %s114, %s130
      %p132 = scmp.eq.s32.totalorder %s28, 0
      %p133 = por %p131, %p132
      %s134 = ssub.s32 %s22, %s29
      %p135 = scmp.eq.s32.totalorder %s134, 0
      %s137 = sadd.s32 %s136, 1
      %s138 = scalar_select %p135, %s136, %s137
      %p141 = pneg %p135
      %p142 = scmp.eq.s32.totalorder %s22, 1
      %p143 = por %p141, %p142
      %p144 = scmp.ne.s32.totalorder %s136, %s139
      %p145 = scmp.eq.s32.totalorder %s22, 0
      %p146 = por %p144, %p145
      %p147 = scmp.ne.s32.totalorder %s136, %s139
      %p148 = scmp.eq.s32.totalorder %s27, 1
      %p149 = por %p147, %p148
      %p150 = scmp.ne.s32.totalorder %s139, %s140
      %p151 = scmp.eq.s32.totalorder %s27, 0
      %p152 = por %p150, %p151
      %p153 = scmp.ne.s32.totalorder %s139, %s140
      %p154 = scmp.eq.s32.totalorder %s28, 1
      %p155 = por %p153, %p154
      %p157 = scmp.ne.s32.totalorder %s140, %s156
      %p158 = scmp.eq.s32.totalorder %s28, 0
      %p159 = por %p157, %p158
      %s161 = sadd.s32 %s160, 1
      %p164 = scmp.eq.s32.totalorder %s22, 1
      %p165 = scmp.ne.s32.totalorder %s160, %s162
      %p166 = scmp.eq.s32.totalorder %s22, 0
      %p167 = por %p165, %p166
      %p168 = scmp.ne.s32.totalorder %s160, %s162
      %p169 = scmp.eq.s32.totalorder %s27, 1
      %p170 = por %p168, %p169
      %p171 = scmp.ne.s32.totalorder %s162, %s163
      %p172 = scmp.eq.s32.totalorder %s27, 0
      %p173 = por %p171, %p172
      %p174 = scmp.ne.s32.totalorder %s162, %s163
      %p175 = scmp.eq.s32.totalorder %s28, 1
      %p176 = por %p174, %p175
      %p178 = scmp.ne.s32.totalorder %s163, %s177
      %p179 = scmp.eq.s32.totalorder %s28, 0
      %p180 = por %p178, %p179
      %s182 = sadd.s32 %s181, 1
      %p185 = scmp.eq.s32.totalorder %s22, 1
      %p186 = scmp.ne.s32.totalorder %s181, %s183
      %p187 = scmp.eq.s32.totalorder %s22, 0
      %p188 = por %p186, %p187
      %p189 = scmp.ne.s32.totalorder %s181, %s183
      %p190 = scmp.eq.s32.totalorder %s27, 1
      %p191 = por %p189, %p190
      %p192 = scmp.ne.s32.totalorder %s183, %s184
      %p193 = scmp.eq.s32.totalorder %s27, 0
      %p194 = por %p192, %p193
      %p195 = scmp.ne.s32.totalorder %s183, %s184
      %p196 = scmp.eq.s32.totalorder %s28, 1
      %p197 = por %p195, %p196
      %p199 = scmp.ne.s32.totalorder %s184, %s198
      %p200 = scmp.eq.s32.totalorder %s28, 0
      %p201 = por %p199, %p200
      %s202 = ssub.s32 %s22, %s29
      %p203 = scmp.eq.s32.totalorder %s202, 0
      %s205 = sadd.s32 %s204, 1
      %s206 = scalar_select %p203, %s204, %s205
      %p209 = pneg %p203
      %p210 = scmp.eq.s32.totalorder %s22, 1
      %p211 = por %p209, %p210
      %p212 = scmp.ne.s32.totalorder %s204, %s207
      %p213 = scmp.eq.s32.totalorder %s22, 0
      %p214 = por %p212, %p213
      %p215 = scmp.ne.s32.totalorder %s204, %s207
      %p216 = scmp.eq.s32.totalorder %s27, 1
      %p217 = por %p215, %p216
      %p218 = scmp.ne.s32.totalorder %s207, %s208
      %p219 = scmp.eq.s32.totalorder %s27, 0
      %p220 = por %p218, %p219
      %p221 = scmp.ne.s32.totalorder %s207, %s208
      %p222 = scmp.eq.s32.totalorder %s28, 1
      %p223 = por %p221, %p222
      %p225 = scmp.ne.s32.totalorder %s208, %s224
      %p226 = scmp.eq.s32.totalorder %s28, 0
      %p227 = por %p225, %p226
      %p228 = scmp.le.s32.totalorder 1, %s22
      %p229 = scmp.lt.s32.totalorder %s22, 3
      %p230 = pnand %p228, %p229
      %p231 = pneg %p230
      // Predicated region
      $region9: #{tpu_custom_call.1} parent=5 // pred_check
        _
      $region10: #{tpu_custom_call.1} parent=5 // pred_check_branch
        %233 = sbr.rel (%p230) target = $region12
      $region11: #{tpu_custom_call.1} parent=5 // pred_region
        %s234 = ssub.s32 %s22, 1
        // Predicated region
        $region13: #{tpu_custom_call.1} parent=11 // pred_check
          %p235 = pneg %p173
        $region14: #{tpu_custom_call.1} parent=11 // pred_check_branch
          %237 = sbr.rel (%p235) target = $region16
        $region15: #{tpu_custom_call.1} parent=11 // pred_region
          _
        $region16: #{tpu_custom_call.1} parent=11 // pred_fallthru
          _
        // Predicated region
        $region17: #{tpu_custom_call.1} parent=11 // pred_check
          %p238 = pneg %p194
        $region18: #{tpu_custom_call.1} parent=11 // pred_check_branch
          %240 = sbr.rel (%p238) target = $region20
        $region19: #{tpu_custom_call.1} parent=11 // pred_region
          _
        $region20: #{tpu_custom_call.1} parent=11 // pred_fallthru
          _
      $region12: #{tpu_custom_call.1} parent=5 // pred_fallthru
        _
      %p241 = scmp.lt.s32.totalorder %s22, 2
      // Predicated region
      $region21: #{tpu_custom_call.1} parent=5 // pred_check
        %p242 = pneg %p241
      $region22: #{tpu_custom_call.1} parent=5 // pred_check_branch
        %244 = sbr.rel (%p242) target = $region24
      $region23: #{tpu_custom_call.1} parent=5 // pred_region
        // Predicated region
        $region25: #{tpu_custom_call.1} parent=23 // pred_check
          %p245 = pneg %p42
        $region26: #{tpu_custom_call.1} parent=23 // pred_check_branch
          %247 = sbr.rel (%p245) target = $region28
        $region27: #{tpu_custom_call.1} parent=23 // pred_region
          %s248 = sand.u32 %s32, 1
          %s249 = scalar_lea.sflag [#allocation3], %s248
          %s250 = sand.u32 %s32, 1
          %s251 = smul.addr %s250, 32
          %s252 = scalar_lea.vmem [#allocation2], %s251
          %s254 = ssub.s32 512, 512
          %255 = vsyncadd %s249, %s254
          %s256 = smul.addr %s22, 8
          %s257 = smul.addr %s256, 64
          %s258 = scalar_lea.hbm %s0, %s257
          %s259 = sshll.u32 %s252, 4
          %s260 = int_to_ptr.vmem [resolvable:$true] %s259
          %265 = dma.hbm_to_vmem [thread:$0]  %s258, 512, %s260, %s249, 64, 64, 4
        $region28: #{tpu_custom_call.1} parent=23 // pred_fallthru
          _
        // Predicated region
        $region29: #{tpu_custom_call.1} parent=23 // pred_check
          %p266 = pneg %p68
        $region30: #{tpu_custom_call.1} parent=23 // pred_check_branch
          %268 = sbr.rel (%p266) target = $region32
        $region31: #{tpu_custom_call.1} parent=23 // pred_region
          %p269 = scmp.lt.s32.totalorder %s22, 1
          %s270 = scalar_select %p269, %s22, 1
          %s271 = smul.addr %s270, 16
          %s272 = smul.addr %s271, 8
          %s273 = scalar_lea.vmem %s1, %s272
        $region32: #{tpu_custom_call.1} parent=23 // pred_fallthru
          _
        // Predicated region
        $region33: #{tpu_custom_call.1} parent=23 // pred_check
          %p274 = pneg %p94
        $region34: #{tpu_custom_call.1} parent=23 // pred_check_branch
          %276 = sbr.rel (%p274) target = $region36
        $region35: #{tpu_custom_call.1} parent=23 // pred_region
          %p277 = scmp.lt.s32.totalorder %s22, 1
          %s278 = scalar_select %p277, %s22, 1
          %s279 = scalar_lea.vmem %s2, %s278
        $region36: #{tpu_custom_call.1} parent=23 // pred_fallthru
          _
        // Predicated region
        $region37: #{tpu_custom_call.1} parent=23 // pred_check
          %p280 = pneg %p120
        $region38: #{tpu_custom_call.1} parent=23 // pred_check_branch
          %282 = sbr.rel (%p280) target = $region40
        $region39: #{tpu_custom_call.1} parent=23 // pred_region
          %p283 = scmp.lt.s32.totalorder %s22, 1
          %s284 = scalar_select %p283, %s22, 1
          %s285 = smul.addr %s284, 16
          %s286 = smul.addr %s285, 8
          %s287 = scalar_lea.vmem %s3, %s286
        $region40: #{tpu_custom_call.1} parent=23 // pred_fallthru
          _
        // Predicated region
        $region41: #{tpu_custom_call.1} parent=23 // pred_check
          %p288 = pneg %p146
        $region42: #{tpu_custom_call.1} parent=23 // pred_check_branch
          %290 = sbr.rel (%p288) target = $region44
        $region43: #{tpu_custom_call.1} parent=23 // pred_region
          %s291 = sand.u32 %s136, 1
          %s292 = scalar_lea.sflag [#allocation6], %s291
          %s293 = sand.u32 %s136, 1
          %s294 = smul.addr %s293, 64
          %s295 = scalar_lea.vmem [#allocation5], %s294
          %s297 = ssub.s32 1024, 1024
          %298 = vsyncadd %s292, %s297
          %s299 = smul.addr %s22, 8
          %s300 = smul.addr %s299, 128
          %s301 = scalar_lea.hbm %s4, %s300
          %s302 = sshll.u32 %s295, 4
          %s303 = int_to_ptr.vmem [resolvable:$true] %s302
          %308 = dma.hbm_to_vmem [thread:$0]  %s301, 1024, %s303, %s292, 128, 128, 8
        $region44: #{tpu_custom_call.1} parent=23 // pred_fallthru
          _
      $region24: #{tpu_custom_call.1} parent=5 // pred_fallthru
        _
      %p309 = scmp.le.s32.totalorder 1, %s22
      %p310 = scmp.lt.s32.totalorder %s22, 3
      %p311 = pnand %p309, %p310
      %p312 = pneg %p311
      // Predicated region
      $region45: #{tpu_custom_call.1} parent=5 // pred_check
        _
      $region46: #{tpu_custom_call.1} parent=5 // pred_check_branch
        %314 = sbr.rel (%p311) target = $region48
      $region47: #{tpu_custom_call.1} parent=5 // pred_region
        %s315 = ssub.s32 %s22, 1
        %s316 = sand.u32 %s35, 1
        %s317 = scalar_lea.sflag [#allocation3], %s316
        %s318 = sand.u32 %s35, 1
        %s319 = smul.addr %s318, 32
        %s320 = scalar_lea.vmem [#allocation2], %s319
        // Predicated region
        $region49: #{tpu_custom_call.1} parent=47 // pred_check
          %p321 = pneg %p48
        $region50: #{tpu_custom_call.1} parent=47 // pred_check_branch
          %323 = sbr.rel (%p321) target = $region52
        $region51: #{tpu_custom_call.1} parent=47 // pred_region
          %324 = dma.done %s317, 512
        $region52: #{tpu_custom_call.1} parent=47 // pred_fallthru
          _
        %s325 = sand.u32 %s139, 1
        %s326 = scalar_lea.sflag [#allocation6], %s325
        %s327 = sand.u32 %s139, 1
        %s328 = smul.addr %s327, 64
        %s329 = scalar_lea.vmem [#allocation5], %s328
        // Predicated region
        $region53: #{tpu_custom_call.1} parent=47 // pred_check
          %p330 = pneg %p152
        $region54: #{tpu_custom_call.1} parent=47 // pred_check_branch
          %332 = sbr.rel (%p330) target = $region56
        $region55: #{tpu_custom_call.1} parent=47 // pred_region
          %333 = dma.done %s326, 1024
        $region56: #{tpu_custom_call.1} parent=47 // pred_fallthru
          _
        %s334 = sand.u32 %s35, 1
        %s335 = scalar_lea.sflag [#allocation3], %s334
        %s336 = sand.u32 %s35, 1
        %s337 = smul.addr %s336, 32
        %s338 = scalar_lea.vmem [#allocation2], %s337
        %p339 = pneg %p48
        %p340 = pneg %p45
        %p341 = scmp.lt.s32.totalorder %s27, 1
        %s342 = scalar_select %p341, %s27, 1
        %s343 = smul.addr %s342, 16
        %s344 = smul.addr %s343, 8
        %s345 = scalar_lea.vmem %s1, %s344
        %p346 = pneg %p74
        %p347 = pneg %p71
        %p348 = scmp.lt.s32.totalorder %s27, 1
        %s349 = scalar_select %p348, %s27, 1
        %s350 = scalar_lea.vmem %s2, %s349
        %p351 = pneg %p100
        %p352 = pneg %p97
        %p353 = scmp.lt.s32.totalorder %s27, 1
        %s354 = scalar_select %p353, %s27, 1
        %s355 = smul.addr %s354, 16
        %s356 = smul.addr %s355, 8
        %s357 = scalar_lea.vmem %s3, %s356
        %p358 = pneg %p126
        %p359 = pneg %p123
        %s360 = sand.u32 %s139, 1
        %s361 = scalar_lea.sflag [#allocation6], %s360
        %s362 = sand.u32 %s139, 1
        %s363 = smul.addr %s362, 64
        %s364 = scalar_lea.vmem [#allocation5], %s363
        %p365 = pneg %p152
        %p366 = pneg %p149
        %p367 = pneg %p173
        %p368 = pneg %p170
        %p369 = pneg %p194
        %p370 = pneg %p191
        %p371 = pneg %p220
        %p372 = pneg %p217
        %s373 = sand.u32 %s207, 1
        %s374 = scalar_lea.sflag [#allocation4], %s373
        %s375 = sand.u32 %s207, 1
        %s376 = smul.addr %s375, 64
        %s377 = scalar_lea.vmem [#allocation7], %s376
        %p378 = scmp.lt.s32.totalorder %s27, 1
        %s379 = scalar_select %p378, %s27, 1
        %s380 = smul.addr %s379, 16
        %s381 = smul.addr %s380, 8
        %s382 = scalar_lea.vmem %s1, %s381
        %p383 = scmp.lt.s32.totalorder %s27, 1
        %s384 = scalar_select %p383, %s27, 1
        %s385 = scalar_lea.vmem %s2, %s384
        %p386 = scmp.lt.s32.totalorder %s27, 1
        %s387 = scalar_select %p386, %s27, 1
        %s388 = smul.addr %s387, 16
        %s389 = smul.addr %s388, 8
        %s390 = scalar_lea.vmem %s3, %s389
        %v392 = vld [vmem:[%s382] sm:$0xff]
        %v393 = vld [vmem:[%s382 + $0x8] sm:$0xff]
        %v394 = vld [vmem:[%s382 + $0x10] sm:$0xff]
        %v395 = vld [vmem:[%s382 + $0x18] sm:$0xff]
        %v396 = vld [vmem:[%s382 + $0x20] sm:$0xff]
        %v397 = vld [vmem:[%s382 + $0x28] sm:$0xff]
        %v398 = vld [vmem:[%s382 + $0x30] sm:$0xff]
        %v399 = vld [vmem:[%s382 + $0x38] sm:$0xff]
        %v400 = vld [vmem:[%s382 + $0x40] sm:$0xff]
        %v401 = vld [vmem:[%s382 + $0x48] sm:$0xff]
        %v402 = vld [vmem:[%s382 + $0x50] sm:$0xff]
        %v403 = vld [vmem:[%s382 + $0x58] sm:$0xff]
        %v404 = vld [vmem:[%s382 + $0x60] sm:$0xff]
        %v405 = vld [vmem:[%s382 + $0x68] sm:$0xff]
        %v406 = vld [vmem:[%s382 + $0x70] sm:$0xff]
        %v407 = vld [vmem:[%s382 + $0x78] sm:$0xff]
        %v408 = vld [vmem:[%s385] sm:$0x1]
        %v409 = vlaneseq
        %v410 = vand.u32 %v409, 127
        %411 = vset.pattern.permute.xlu0 0
        %412 = vperm.xlu0 %411, %v392
        %v413 = vpop.permute.xlu0 %412
        %414 = vset.pattern.permute.xlu0 0
        %415 = vperm.xlu0 %414, %v393
        %v416 = vpop.permute.xlu0 %415
        %417 = vset.pattern.permute.xlu0 0
        %418 = vperm.xlu0 %417, %v394
        %v419 = vpop.permute.xlu0 %418
        %420 = vset.pattern.permute.xlu0 0
        %421 = vperm.xlu0 %420, %v395
        %v422 = vpop.permute.xlu0 %421
        %423 = vset.pattern.permute.xlu0 0
        %424 = vperm.xlu0 %423, %v396
        %v425 = vpop.permute.xlu0 %424
        %426 = vset.pattern.permute.xlu0 0
        %427 = vperm.xlu0 %426, %v397
        %v428 = vpop.permute.xlu0 %427
        %429 = vset.pattern.permute.xlu0 0
        %430 = vperm.xlu0 %429, %v398
        %v431 = vpop.permute.xlu0 %430
        %432 = vset.pattern.permute.xlu0 0
        %433 = vperm.xlu0 %432, %v399
        %v434 = vpop.permute.xlu0 %433
        %435 = vset.pattern.permute.xlu0 0
        %436 = vperm.xlu0 %435, %v400
        %v437 = vpop.permute.xlu0 %436
        %438 = vset.pattern.permute.xlu0 0
        %439 = vperm.xlu0 %438, %v401
        %v440 = vpop.permute.xlu0 %439
        %441 = vset.pattern.permute.xlu0 0
        %442 = vperm.xlu0 %441, %v402
        %v443 = vpop.permute.xlu0 %442
        %444 = vset.pattern.permute.xlu0 0
        %445 = vperm.xlu0 %444, %v403
        %v446 = vpop.permute.xlu0 %445
        %447 = vset.pattern.permute.xlu0 0
        %448 = vperm.xlu0 %447, %v404
        %v449 = vpop.permute.xlu0 %448
        %450 = vset.pattern.permute.xlu0 0
        %451 = vperm.xlu0 %450, %v405
        %v452 = vpop.permute.xlu0 %451
        %453 = vset.pattern.permute.xlu0 0
        %454 = vperm.xlu0 %453, %v406
        %v455 = vpop.permute.xlu0 %454
        %456 = vset.pattern.permute.xlu0 0
        %457 = vperm.xlu0 %456, %v407
        %v458 = vpop.permute.xlu0 %457
        %vm459 = vcmp.eq.s32.totalorder %v410, %v413
        %vm460 = vcmp.eq.s32.totalorder %v410, %v416
        %vm461 = vcmp.eq.s32.totalorder %v410, %v419
        %vm462 = vcmp.eq.s32.totalorder %v410, %v422
        %vm463 = vcmp.eq.s32.totalorder %v410, %v425
        %vm464 = vcmp.eq.s32.totalorder %v410, %v428
        %vm465 = vcmp.eq.s32.totalorder %v410, %v431
        %vm466 = vcmp.eq.s32.totalorder %v410, %v434
        %vm467 = vcmp.eq.s32.totalorder %v410, %v437
        %vm468 = vcmp.eq.s32.totalorder %v410, %v440
        %vm469 = vcmp.eq.s32.totalorder %v410, %v443
        %vm470 = vcmp.eq.s32.totalorder %v410, %v446
        %vm471 = vcmp.eq.s32.totalorder %v410, %v449
        %vm472 = vcmp.eq.s32.totalorder %v410, %v452
        %vm473 = vcmp.eq.s32.totalorder %v410, %v455
        %vm474 = vcmp.eq.s32.totalorder %v410, %v458
        %v475 = vsel %vm459, 1, 0
        %v476 = vsel %vm460, 1, 0
        %v477 = vsel %vm461, 1, 0
        %v478 = vsel %vm462, 1, 0
        %v479 = vsel %vm463, 1, 0
        %v480 = vsel %vm464, 1, 0
        %v481 = vsel %vm465, 1, 0
        %v482 = vsel %vm466, 1, 0
        %v483 = vsel %vm467, 1, 0
        %v484 = vsel %vm468, 1, 0
        %v485 = vsel %vm469, 1, 0
        %v486 = vsel %vm470, 1, 0
        %v487 = vsel %vm471, 1, 0
        %v488 = vsel %vm472, 1, 0
        %v489 = vsel %vm473, 1, 0
        %v490 = vsel %vm474, 1, 0
        %v491 = vcvt.s32.f32 %v475
        %v492 = vcvt.s32.f32 %v476
        %v493 = vcvt.s32.f32 %v477
        %v494 = vcvt.s32.f32 %v478
        %v495 = vcvt.s32.f32 %v479
        %v496 = vcvt.s32.f32 %v480
        %v497 = vcvt.s32.f32 %v481
        %v498 = vcvt.s32.f32 %v482
        %v499 = vcvt.s32.f32 %v483
        %v500 = vcvt.s32.f32 %v484
        %v501 = vcvt.s32.f32 %v485
        %v502 = vcvt.s32.f32 %v486
        %v503 = vcvt.s32.f32 %v487
        %v504 = vcvt.s32.f32 %v488
        %v505 = vcvt.s32.f32 %v489
        %v506 = vcvt.s32.f32 %v490
        %v507 = vpack.c.bf16 %v492, %v491
        %v508 = vpack.c.bf16 %v494, %v493
        %v509 = vpack.c.bf16 %v496, %v495
        %v510 = vpack.c.bf16 %v498, %v497
        %v511 = vpack.c.bf16 %v500, %v499
        %v512 = vpack.c.bf16 %v502, %v501
        %v513 = vpack.c.bf16 %v504, %v503
        %v514 = vpack.c.bf16 %v506, %v505
        %v515 = vlaneseq
        %v516 = vshrl.u32 %v515, 7
        %v517 = vadd.s32 %v516, 8
        %v518 = vadd.s32 %v516, 16
        %v519 = vadd.s32 %v516, 24
        %v520 = vadd.s32 %v516, 32
        %v521 = vadd.s32 %v516, 40
        %v522 = vadd.s32 %v516, 48
        %v523 = vadd.s32 %v516, 56
        %v524 = vlaneseq
        %v525 = vshrl.u32 %v524, 7
        %v526 = vsub.s32 0, %v525
        %v527 = vrot.slane %v408, %v526
        %vm528 = vcmp.eq.s32.totalorder %v516, %v527
        %vm529 = vcmp.eq.s32.totalorder %v517, %v527
        %vm530 = vcmp.eq.s32.totalorder %v518, %v527
        %vm531 = vcmp.eq.s32.totalorder %v519, %v527
        %vm532 = vcmp.eq.s32.totalorder %v520, %v527
        %vm533 = vcmp.eq.s32.totalorder %v521, %v527
        %vm534 = vcmp.eq.s32.totalorder %v522, %v527
        %vm535 = vcmp.eq.s32.totalorder %v523, %v527
        %v536 = vsel %vm528, 1, 0
        %v537 = vsel %vm529, 1, 0
        %v538 = vsel %vm530, 1, 0
        %v539 = vsel %vm531, 1, 0
        %v540 = vsel %vm532, 1, 0
        %v541 = vsel %vm533, 1, 0
        %v542 = vsel %vm534, 1, 0
        %v543 = vsel %vm535, 1, 0
        %v544 = vcvt.s32.f32 %v536
        %v545 = vcvt.s32.f32 %v537
        %v546 = vcvt.s32.f32 %v538
        %v547 = vcvt.s32.f32 %v539
        %v548 = vcvt.s32.f32 %v540
        %v549 = vcvt.s32.f32 %v541
        %v550 = vcvt.s32.f32 %v542
        %v551 = vcvt.s32.f32 %v543
        %v552 = vpack.c.bf16 %v545, %v544
        %v553 = vpack.c.bf16 %v547, %v546
        %v554 = vpack.c.bf16 %v549, %v548
        %v555 = vpack.c.bf16 %v551, %v550
        %556 = vset.pattern.permute.xlu0 1
        %557 = vperm.xlu0 %556, %v392
        %v558 = vpop.permute.xlu0 %557
        %559 = vset.pattern.permute.xlu0 1
        %560 = vperm.xlu0 %559, %v393
        %v561 = vpop.permute.xlu0 %560
        %562 = vset.pattern.permute.xlu0 1
        %563 = vperm.xlu0 %562, %v394
        %v564 = vpop.permute.xlu0 %563
        %565 = vset.pattern.permute.xlu0 1
        %566 = vperm.xlu0 %565, %v395
        %v567 = vpop.permute.xlu0 %566
        %568 = vset.pattern.permute.xlu0 1
        %569 = vperm.xlu0 %568, %v396
        %v570 = vpop.permute.xlu0 %569
        %571 = vset.pattern.permute.xlu0 1
        %572 = vperm.xlu0 %571, %v397
        %v573 = vpop.permute.xlu0 %572
        %574 = vset.pattern.permute.xlu0 1
        %575 = vperm.xlu0 %574, %v398
        %v576 = vpop.permute.xlu0 %575
        %577 = vset.pattern.permute.xlu0 1
        %578 = vperm.xlu0 %577, %v399
        %v579 = vpop.permute.xlu0 %578
        %580 = vset.pattern.permute.xlu0 1
        %581 = vperm.xlu0 %580, %v400
        %v582 = vpop.permute.xlu0 %581
        %583 = vset.pattern.permute.xlu0 1
        %584 = vperm.xlu0 %583, %v401
        %v585 = vpop.permute.xlu0 %584
        %586 = vset.pattern.permute.xlu0 1
        %587 = vperm.xlu0 %586, %v402
        %v588 = vpop.permute.xlu0 %587
        %589 = vset.pattern.permute.xlu0 1
        %590 = vperm.xlu0 %589, %v403
        %v591 = vpop.permute.xlu0 %590
        %592 = vset.pattern.permute.xlu0 1
        %593 = vperm.xlu0 %592, %v404
        %v594 = vpop.permute.xlu0 %593
        %595 = vset.pattern.permute.xlu0 1
        %596 = vperm.xlu0 %595, %v405
        %v597 = vpop.permute.xlu0 %596
        %598 = vset.pattern.permute.xlu0 1
        %599 = vperm.xlu0 %598, %v406
        %v600 = vpop.permute.xlu0 %599
        %601 = vset.pattern.permute.xlu0 1
        %602 = vperm.xlu0 %601, %v407
        %v603 = vpop.permute.xlu0 %602
        %vm604 = vcmp.eq.s32.totalorder %v410, %v558
        %vm605 = vcmp.eq.s32.totalorder %v410, %v561
        %vm606 = vcmp.eq.s32.totalorder %v410, %v564
        %vm607 = vcmp.eq.s32.totalorder %v410, %v567
        %vm608 = vcmp.eq.s32.totalorder %v410, %v570
        %vm609 = vcmp.eq.s32.totalorder %v410, %v573
        %vm610 = vcmp.eq.s32.totalorder %v410, %v576
        %vm611 = vcmp.eq.s32.totalorder %v410, %v579
        %vm612 = vcmp.eq.s32.totalorder %v410, %v582
        %vm613 = vcmp.eq.s32.totalorder %v410, %v585
        %vm614 = vcmp.eq.s32.totalorder %v410, %v588
        %vm615 = vcmp.eq.s32.totalorder %v410, %v591
        %vm616 = vcmp.eq.s32.totalorder %v410, %v594
        %vm617 = vcmp.eq.s32.totalorder %v410, %v597
        %vm618 = vcmp.eq.s32.totalorder %v410, %v600
        %vm619 = vcmp.eq.s32.totalorder %v410, %v603
        %v620 = vsel %vm604, 1, 0
        %v621 = vsel %vm605, 1, 0
        %v622 = vsel %vm606, 1, 0
        %v623 = vsel %vm607, 1, 0
        %v624 = vsel %vm608, 1, 0
        %v625 = vsel %vm609, 1, 0
        %v626 = vsel %vm610, 1, 0
        %v627 = vsel %vm611, 1, 0
        %v628 = vsel %vm612, 1, 0
        %v629 = vsel %vm613, 1, 0
        %v630 = vsel %vm614, 1, 0
        %v631 = vsel %vm615, 1, 0
        %v632 = vsel %vm616, 1, 0
        %v633 = vsel %vm617, 1, 0
        %v634 = vsel %vm618, 1, 0
        %v635 = vsel %vm619, 1, 0
        %v636 = vcvt.s32.f32 %v620
        %v637 = vcvt.s32.f32 %v621
        %v638 = vcvt.s32.f32 %v622
        %v639 = vcvt.s32.f32 %v623
        %v640 = vcvt.s32.f32 %v624
        %v641 = vcvt.s32.f32 %v625
        %v642 = vcvt.s32.f32 %v626
        %v643 = vcvt.s32.f32 %v627
        %v644 = vcvt.s32.f32 %v628
        %v645 = vcvt.s32.f32 %v629
        %v646 = vcvt.s32.f32 %v630
        %v647 = vcvt.s32.f32 %v631
        %v648 = vcvt.s32.f32 %v632
        %v649 = vcvt.s32.f32 %v633
        %v650 = vcvt.s32.f32 %v634
        %v651 = vcvt.s32.f32 %v635
        %v652 = vpack.c.bf16 %v637, %v636
        %v653 = vpack.c.bf16 %v639, %v638
        %v654 = vpack.c.bf16 %v641, %v640
        %v655 = vpack.c.bf16 %v643, %v642
        %v656 = vpack.c.bf16 %v645, %v644
        %v657 = vpack.c.bf16 %v647, %v646
        %v658 = vpack.c.bf16 %v649, %v648
        %v659 = vpack.c.bf16 %v651, %v650
        %v660 = vld [vmem:[%s5] sm:$0xf]
        %v661 = vld [vmem:[%s5 + $0x4] sm:$0xf]
        %v662 = vld [vmem:[%s5 + $0x8] sm:$0xf]
        %v663 = vld [vmem:[%s5 + $0xc] sm:$0xf]
        %v664 = vld [vmem:[%s5 + $0x10] sm:$0xf]
        %v665 = vld [vmem:[%s5 + $0x14] sm:$0xf]
        %v666 = vld [vmem:[%s5 + $0x18] sm:$0xf]
        %v667 = vld [vmem:[%s5 + $0x1c] sm:$0xf]
        %v668 = vld [vmem:[%s5 + $0x20] sm:$0xf]
        %v669 = vld [vmem:[%s5 + $0x24] sm:$0xf]
        %v670 = vld [vmem:[%s5 + $0x28] sm:$0xf]
        %v671 = vld [vmem:[%s5 + $0x2c] sm:$0xf]
        %v672 = vld [vmem:[%s5 + $0x30] sm:$0xf]
        %v673 = vld [vmem:[%s5 + $0x34] sm:$0xf]
        %v674 = vld [vmem:[%s5 + $0x38] sm:$0xf]
        %v675 = vld [vmem:[%s5 + $0x3c] sm:$0xf]
        %v692 = vunpack.c.l.b16 %v660
        %v693 = vunpack.c.l.b16 %v661
        %v694 = vunpack.c.l.b16 %v662
        %v695 = vunpack.c.l.b16 %v663
        %v696 = vunpack.c.l.b16 %v664
        %v697 = vunpack.c.l.b16 %v665
        %v698 = vunpack.c.l.b16 %v666
        %v699 = vunpack.c.l.b16 %v667
        %v700 = vunpack.c.l.b16 %v668
        %v701 = vunpack.c.l.b16 %v669
        %v702 = vunpack.c.l.b16 %v670
        %v703 = vunpack.c.l.b16 %v671
        %v704 = vunpack.c.l.b16 %v672
        %v705 = vunpack.c.l.b16 %v673
        %v706 = vunpack.c.l.b16 %v674
        %v707 = vunpack.c.l.b16 %v675
        %v708 = vpack.c.b16 %v693, %v692
        %v709 = vpack.c.b16 %v695, %v694
        %v710 = vpack.c.b16 %v697, %v696
        %v711 = vpack.c.b16 %v699, %v698
        %v712 = vpack.c.b16 %v701, %v700
        %v713 = vpack.c.b16 %v703, %v702
        %v714 = vpack.c.b16 %v705, %v704
        %v715 = vpack.c.b16 %v707, %v706
        %724 = vmatprep.subr.bf16.mxu0 0
        %725 = vmatpush1.bf16.msra.mxu0 %v715
        %726 = vmatprep.subr.bf16.mxu0 0
        %727 = vmatpush1.bf16.msra.mxu0 %v714
        %728 = vmatprep.subr.bf16.mxu0 0
        %729 = vmatpush1.bf16.msra.mxu0 %v713
        %730 = vmatprep.subr.bf16.mxu0 0
        %731 = vmatpush1.bf16.msra.mxu0 %v712
        %732 = vmatprep.subr.bf16.mxu0 0
        %733 = vmatpush1.bf16.msra.mxu0 %v711
        %734 = vmatprep.subr.bf16.mxu0 0
        %735 = vmatpush1.bf16.msra.mxu0 %v710
        %736 = vmatprep.subr.bf16.mxu0 0
        %737 = vmatpush1.bf16.msra.mxu0 %v709
        %738 = vmatprep.subr.bf16.mxu0 0
        %739 = vmatpush1.bf16.msra.mxu0 %v708
        %740 = vmatprep.subr.bf16.mxu0 0
        %741 = vmatpush2.bf16.msra.mxu0 0
        %742 = vmatprep.subr.bf16.mxu0 0
        %743 = vmatpush2.bf16.msra.mxu0 0
        %744 = vmatprep.subr.bf16.mxu0 0
        %745 = vmatpush2.bf16.msra.mxu0 0
        %746 = vmatprep.subr.bf16.mxu0 0
        %747 = vmatpush2.bf16.msra.mxu0 0
        %748 = vmatprep.subr.bf16.mxu0 0
        %749 = vmatpush2.bf16.msra.mxu0 0
        %750 = vmatprep.subr.bf16.mxu0 0
        %751 = vmatpush2.bf16.msra.mxu0 0
        %752 = vmatprep.subr.bf16.mxu0 0
        %753 = vmatpush2.bf16.msra.mxu0 0
        %754 = vmatprep.subr.bf16.mxu0 0
        %755 = vmatpush2.bf16.msra.mxu0 0
        %756 = vmatprep.mubr.bf16.mxu0 0
        %757 = vmatmul.mubr.bf16.gmra.mxu0 %v652
        %v758 = vpop.f32.mrf.mxu0
        %v759 = vadd.f32 0.0, %v758
        %v760 = vpop.f32.mrf.mxu0
        %v761 = vpop.f32.mrf.mxu0
        %v762 = vadd.f32 0.0, %v761
        %v763 = vpop.f32.mrf.mxu0
        %764 = vmatprep.mubr.bf16.mxu0 0
        %765 = vmatmul.mubr.bf16.gmra.mxu0 %v653
        %v766 = vpop.f32.mrf.mxu0
        %v767 = vadd.f32 0.0, %v766
        %v768 = vpop.f32.mrf.mxu0
        %v769 = vpop.f32.mrf.mxu0
        %v770 = vadd.f32 0.0, %v769
        %v771 = vpop.f32.mrf.mxu0
        %772 = vmatprep.mubr.bf16.mxu0 0
        %773 = vmatmul.mubr.bf16.gmra.mxu0 %v654
        %v774 = vpop.f32.mrf.mxu0
        %v775 = vadd.f32 0.0, %v774
        %v776 = vpop.f32.mrf.mxu0
        %v777 = vpop.f32.mrf.mxu0
        %v778 = vadd.f32 0.0, %v777
        %v779 = vpop.f32.mrf.mxu0
        %780 = vmatprep.mubr.bf16.mxu0 0
        %781 = vmatmul.mubr.bf16.gmra.mxu0 %v655
        %v782 = vpop.f32.mrf.mxu0
        %v783 = vadd.f32 0.0, %v782
        %v784 = vpop.f32.mrf.mxu0
        %v785 = vpop.f32.mrf.mxu0
        %v786 = vadd.f32 0.0, %v785
        %v787 = vpop.f32.mrf.mxu0
        %788 = vmatprep.mubr.bf16.mxu0 0
        %789 = vmatmul.mubr.bf16.gmra.mxu0 %v656
        %v790 = vpop.f32.mrf.mxu0
        %v791 = vadd.f32 0.0, %v790
        %v792 = vpop.f32.mrf.mxu0
        %v793 = vpop.f32.mrf.mxu0
        %v794 = vadd.f32 0.0, %v793
        %v795 = vpop.f32.mrf.mxu0
        %796 = vmatprep.mubr.bf16.mxu0 0
        %797 = vmatmul.mubr.bf16.gmra.mxu0 %v657
        %v798 = vpop.f32.mrf.mxu0
        %v799 = vadd.f32 0.0, %v798
        %v800 = vpop.f32.mrf.mxu0
        %v801 = vpop.f32.mrf.mxu0
        %v802 = vadd.f32 0.0, %v801
        %v803 = vpop.f32.mrf.mxu0
        %804 = vmatprep.mubr.bf16.mxu0 0
        %805 = vmatmul.mubr.bf16.gmra.mxu0 %v658
        %v806 = vpop.f32.mrf.mxu0
        %v807 = vadd.f32 0.0, %v806
        %v808 = vpop.f32.mrf.mxu0
        %v809 = vpop.f32.mrf.mxu0
        %v810 = vadd.f32 0.0, %v809
        %v811 = vpop.f32.mrf.mxu0
        %812 = vmatprep.mubr.bf16.mxu0 0
        %813 = vmatmul.mubr.bf16.gmra.mxu0 %v659
        %v814 = vpop.f32.mrf.mxu0
        %v815 = vadd.f32 0.0, %v814
        %v816 = vpop.f32.mrf.mxu0
        %v817 = vpop.f32.mrf.mxu0
        %v818 = vadd.f32 0.0, %v817
        %v819 = vpop.f32.mrf.mxu0
        %820 = vdwg.mxu0
        %v821 = vld [vmem:[%s390] sm:$0xff]
        %v822 = vld [vmem:[%s390 + $0x8] sm:$0xff]
        %v823 = vld [vmem:[%s390 + $0x10] sm:$0xff]
        %v824 = vld [vmem:[%s390 + $0x18] sm:$0xff]
        %v825 = vld [vmem:[%s390 + $0x20] sm:$0xff]
        %v826 = vld [vmem:[%s390 + $0x28] sm:$0xff]
        %v827 = vld [vmem:[%s390 + $0x30] sm:$0xff]
        %v828 = vld [vmem:[%s390 + $0x38] sm:$0xff]
        %v829 = vld [vmem:[%s390 + $0x40] sm:$0xff]
        %v830 = vld [vmem:[%s390 + $0x48] sm:$0xff]
        %v831 = vld [vmem:[%s390 + $0x50] sm:$0xff]
        %v832 = vld [vmem:[%s390 + $0x58] sm:$0xff]
        %v833 = vld [vmem:[%s390 + $0x60] sm:$0xff]
        %v834 = vld [vmem:[%s390 + $0x68] sm:$0xff]
        %v835 = vld [vmem:[%s390 + $0x70] sm:$0xff]
        %v836 = vld [vmem:[%s390 + $0x78] sm:$0xff]
        %v837 = vld [vmem:[%s6] sm:$0x1]
        %839 = vset.pattern.permute.xlu0 0
        %840 = vperm.xlu0 %839, %v821
        %v841 = vpop.permute.xlu0 %840
        %844 = vset.pattern.permute.xlu0 0
        %845 = vperm.xlu0 %844, %v822
        %v846 = vpop.permute.xlu0 %845
        %849 = vset.pattern.permute.xlu0 0
        %850 = vperm.xlu0 %849, %v823
        %v851 = vpop.permute.xlu0 %850
        %854 = vset.pattern.permute.xlu0 0
        %855 = vperm.xlu0 %854, %v824
        %v856 = vpop.permute.xlu0 %855
        %859 = vset.pattern.permute.xlu0 0
        %860 = vperm.xlu0 %859, %v825
        %v861 = vpop.permute.xlu0 %860
        %864 = vset.pattern.permute.xlu0 0
        %865 = vperm.xlu0 %864, %v826
        %v866 = vpop.permute.xlu0 %865
        %869 = vset.pattern.permute.xlu0 0
        %870 = vperm.xlu0 %869, %v827
        %v871 = vpop.permute.xlu0 %870
        %874 = vset.pattern.permute.xlu0 0
        %875 = vperm.xlu0 %874, %v828
        %v876 = vpop.permute.xlu0 %875
        %879 = vset.pattern.permute.xlu0 0
        %880 = vperm.xlu0 %879, %v829
        %v881 = vpop.permute.xlu0 %880
        %884 = vset.pattern.permute.xlu0 0
        %885 = vperm.xlu0 %884, %v830
        %v886 = vpop.permute.xlu0 %885
        %889 = vset.pattern.permute.xlu0 0
        %890 = vperm.xlu0 %889, %v831
        %v891 = vpop.permute.xlu0 %890
        %894 = vset.pattern.permute.xlu0 0
        %895 = vperm.xlu0 %894, %v832
        %v896 = vpop.permute.xlu0 %895
        %899 = vset.pattern.permute.xlu0 0
        %900 = vperm.xlu0 %899, %v833
        %v901 = vpop.permute.xlu0 %900
        %904 = vset.pattern.permute.xlu0 0
        %905 = vperm.xlu0 %904, %v834
        %v906 = vpop.permute.xlu0 %905
        %909 = vset.pattern.permute.xlu0 0
        %910 = vperm.xlu0 %909, %v835
        %v911 = vpop.permute.xlu0 %910
        %914 = vset.pattern.permute.xlu0 0
        %915 = vperm.xlu0 %914, %v836
        %v916 = vpop.permute.xlu0 %915
        %v919 = vlaneseq
        %v920 = vshrl.u32 %v919, 7
        %v921 = vsub.s32 0, %v920
        %v922 = vrot.slane %v837, %v921
        %v924 = vmul.f32 %v841, %v922
        %v925 = vmul.f32 %v846, %v922
        %v926 = vmul.f32 %v851, %v922
        %v927 = vmul.f32 %v856, %v922
        %v928 = vmul.f32 %v861, %v922
        %v929 = vmul.f32 %v866, %v922
        %v930 = vmul.f32 %v871, %v922
        %v931 = vmul.f32 %v876, %v922
        %v932 = vmul.f32 %v881, %v922
        %v933 = vmul.f32 %v886, %v922
        %v934 = vmul.f32 %v891, %v922
        %v935 = vmul.f32 %v896, %v922
        %v936 = vmul.f32 %v901, %v922
        %v937 = vmul.f32 %v906, %v922
        %v938 = vmul.f32 %v911, %v922
        %v939 = vmul.f32 %v916, %v922
        %s940 = scalar_lea.vmem %s6, 1
        %v941 = vld [vmem:[%s940] sm:$0x1]
        %v943 = vlaneseq
        %v944 = vshrl.u32 %v943, 7
        %v945 = vsub.s32 0, %v944
        %v946 = vrot.slane %v941, %v945
        %v948 = vadd.f32 %v924, %v946
        %v949 = vadd.f32 %v925, %v946
        %v950 = vadd.f32 %v926, %v946
        %v951 = vadd.f32 %v927, %v946
        %v952 = vadd.f32 %v928, %v946
        %v953 = vadd.f32 %v929, %v946
        %v954 = vadd.f32 %v930, %v946
        %v955 = vadd.f32 %v931, %v946
        %v956 = vadd.f32 %v932, %v946
        %v957 = vadd.f32 %v933, %v946
        %v958 = vadd.f32 %v934, %v946
        %v959 = vadd.f32 %v935, %v946
        %v960 = vadd.f32 %v936, %v946
        %v961 = vadd.f32 %v937, %v946
        %v962 = vadd.f32 %v938, %v946
        %v963 = vadd.f32 %v939, %v946
        %v964 = vmax.f32 %v948, 0.0
        %v965 = vmax.f32 %v949, 0.0
        %v966 = vmax.f32 %v950, 0.0
        %v967 = vmax.f32 %v951, 0.0
        %v968 = vmax.f32 %v952, 0.0
        %v969 = vmax.f32 %v953, 0.0
        %v970 = vmax.f32 %v954, 0.0
        %v971 = vmax.f32 %v955, 0.0
        %v972 = vmax.f32 %v956, 0.0
        %v973 = vmax.f32 %v957, 0.0
        %v974 = vmax.f32 %v958, 0.0
        %v975 = vmax.f32 %v959, 0.0
        %v976 = vmax.f32 %v960, 0.0
        %v977 = vmax.f32 %v961, 0.0
        %v978 = vmax.f32 %v962, 0.0
        %v979 = vmax.f32 %v963, 0.0
        %v980 = vpack.c.bf16 %v965, %v964
        %v981 = vpack.c.bf16 %v967, %v966
        %v982 = vpack.c.bf16 %v969, %v968
        %v983 = vpack.c.bf16 %v971, %v970
        %v984 = vpack.c.bf16 %v973, %v972
        %v985 = vpack.c.bf16 %v975, %v974
        %v986 = vpack.c.bf16 %v977, %v976
        %v987 = vpack.c.bf16 %v979, %v978
        %s988 = scalar_lea.vmem %s5, 64
        %v989 = vld [vmem:[%s988] sm:$0xf]
        %v990 = vld [vmem:[%s988 + $0x4] sm:$0xf]
        %v991 = vld [vmem:[%s988 + $0x8] sm:$0xf]
        %v992 = vld [vmem:[%s988 + $0xc] sm:$0xf]
        %v993 = vld [vmem:[%s988 + $0x10] sm:$0xf]
        %v994 = vld [vmem:[%s988 + $0x14] sm:$0xf]
        %v995 = vld [vmem:[%s988 + $0x18] sm:$0xf]
        %v996 = vld [vmem:[%s988 + $0x1c] sm:$0xf]
        %v997 = vld [vmem:[%s988 + $0x20] sm:$0xf]
        %v998 = vld [vmem:[%s988 + $0x24] sm:$0xf]
        %v999 = vld [vmem:[%s988 + $0x28] sm:$0xf]
        %v1000 = vld [vmem:[%s988 + $0x2c] sm:$0xf]
        %v1001 = vld [vmem:[%s988 + $0x30] sm:$0xf]
        %v1002 = vld [vmem:[%s988 + $0x34] sm:$0xf]
        %v1003 = vld [vmem:[%s988 + $0x38] sm:$0xf]
        %v1004 = vld [vmem:[%s988 + $0x3c] sm:$0xf]
        %s1005 = scalar_lea.vmem %s6, 2
        %v1006 = vld [vmem:[%s1005] sm:$0x1]
        %v1008 = vlaneseq
        %v1009 = vshrl.u32 %v1008, 7
        %v1010 = vsub.s32 0, %v1009
        %v1011 = vrot.slane %v1006, %v1010
        %v1029 = vunpack.c.l.b16 %v989
        %v1030 = vunpack.c.l.b16 %v990
        %v1031 = vunpack.c.l.b16 %v991
        %v1032 = vunpack.c.l.b16 %v992
        %v1033 = vunpack.c.l.b16 %v993
        %v1034 = vunpack.c.l.b16 %v994
        %v1035 = vunpack.c.l.b16 %v995
        %v1036 = vunpack.c.l.b16 %v996
        %v1037 = vunpack.c.l.b16 %v997
        %v1038 = vunpack.c.l.b16 %v998
        %v1039 = vunpack.c.l.b16 %v999
        %v1040 = vunpack.c.l.b16 %v1000
        %v1041 = vunpack.c.l.b16 %v1001
        %v1042 = vunpack.c.l.b16 %v1002
        %v1043 = vunpack.c.l.b16 %v1003
        %v1044 = vunpack.c.l.b16 %v1004
        %v1045 = vpack.c.b16 %v1030, %v1029
        %v1046 = vpack.c.b16 %v1032, %v1031
        %v1047 = vpack.c.b16 %v1034, %v1033
        %v1048 = vpack.c.b16 %v1036, %v1035
        %v1049 = vpack.c.b16 %v1038, %v1037
        %v1050 = vpack.c.b16 %v1040, %v1039
        %v1051 = vpack.c.b16 %v1042, %v1041
        %v1052 = vpack.c.b16 %v1044, %v1043
        %1061 = vmatprep.subr.bf16.mxu0 0
        %1062 = vmatpush1.bf16.msra.mxu0 %v1052
        %1063 = vmatprep.subr.bf16.mxu0 0
        %1064 = vmatpush1.bf16.msra.mxu0 %v1051
        %1065 = vmatprep.subr.bf16.mxu0 0
        %1066 = vmatpush1.bf16.msra.mxu0 %v1050
        %1067 = vmatprep.subr.bf16.mxu0 0
        %1068 = vmatpush1.bf16.msra.mxu0 %v1049
        %1069 = vmatprep.subr.bf16.mxu0 0
        %1070 = vmatpush1.bf16.msra.mxu0 %v1048
        %1071 = vmatprep.subr.bf16.mxu0 0
        %1072 = vmatpush1.bf16.msra.mxu0 %v1047
        %1073 = vmatprep.subr.bf16.mxu0 0
        %1074 = vmatpush1.bf16.msra.mxu0 %v1046
        %1075 = vmatprep.subr.bf16.mxu0 0
        %1076 = vmatpush1.bf16.msra.mxu0 %v1045
        %1077 = vmatprep.subr.bf16.mxu0 0
        %1078 = vmatpush2.bf16.msra.mxu0 0
        %1079 = vmatprep.subr.bf16.mxu0 0
        %1080 = vmatpush2.bf16.msra.mxu0 0
        %1081 = vmatprep.subr.bf16.mxu0 0
        %1082 = vmatpush2.bf16.msra.mxu0 0
        %1083 = vmatprep.subr.bf16.mxu0 0
        %1084 = vmatpush2.bf16.msra.mxu0 0
        %1085 = vmatprep.subr.bf16.mxu0 0
        %1086 = vmatpush2.bf16.msra.mxu0 0
        %1087 = vmatprep.subr.bf16.mxu0 0
        %1088 = vmatpush2.bf16.msra.mxu0 0
        %1089 = vmatprep.subr.bf16.mxu0 0
        %1090 = vmatpush2.bf16.msra.mxu0 0
        %1091 = vmatprep.subr.bf16.mxu0 0
        %1092 = vmatpush2.bf16.msra.mxu0 0
        %1093 = vmatprep.mubr.bf16.mxu0 0
        %1094 = vmatmul.mubr.bf16.gmra.mxu0 %v980
        %v1095 = vpop.f32.mrf.mxu0
        %v1096 = vadd.f32 %v1011, %v1095
        %v1097 = vpop.f32.mrf.mxu0
        %v1098 = vpop.f32.mrf.mxu0
        %v1099 = vadd.f32 %v1011, %v1098
        %v1100 = vpop.f32.mrf.mxu0
        %1101 = vmatprep.mubr.bf16.mxu0 0
        %1102 = vmatmul.mubr.bf16.gmra.mxu0 %v981
        %v1103 = vpop.f32.mrf.mxu0
        %v1104 = vadd.f32 %v1011, %v1103
        %v1105 = vpop.f32.mrf.mxu0
        %v1106 = vpop.f32.mrf.mxu0
        %v1107 = vadd.f32 %v1011, %v1106
        %v1108 = vpop.f32.mrf.mxu0
        %1109 = vmatprep.mubr.bf16.mxu0 0
        %1110 = vmatmul.mubr.bf16.gmra.mxu0 %v982
        %v1111 = vpop.f32.mrf.mxu0
        %v1112 = vadd.f32 %v1011, %v1111
        %v1113 = vpop.f32.mrf.mxu0
        %v1114 = vpop.f32.mrf.mxu0
        %v1115 = vadd.f32 %v1011, %v1114
        %v1116 = vpop.f32.mrf.mxu0
        %1117 = vmatprep.mubr.bf16.mxu0 0
        %1118 = vmatmul.mubr.bf16.gmra.mxu0 %v983
        %v1119 = vpop.f32.mrf.mxu0
        %v1120 = vadd.f32 %v1011, %v1119
        %v1121 = vpop.f32.mrf.mxu0
        %v1122 = vpop.f32.mrf.mxu0
        %v1123 = vadd.f32 %v1011, %v1122
        %v1124 = vpop.f32.mrf.mxu0
        %1125 = vmatprep.mubr.bf16.mxu0 0
        %1126 = vmatmul.mubr.bf16.gmra.mxu0 %v984
        %v1127 = vpop.f32.mrf.mxu0
        %v1128 = vadd.f32 %v1011, %v1127
        %v1129 = vpop.f32.mrf.mxu0
        %v1130 = vpop.f32.mrf.mxu0
        %v1131 = vadd.f32 %v1011, %v1130
        %v1132 = vpop.f32.mrf.mxu0
        %1133 = vmatprep.mubr.bf16.mxu0 0
        %1134 = vmatmul.mubr.bf16.gmra.mxu0 %v985
        %v1135 = vpop.f32.mrf.mxu0
        %v1136 = vadd.f32 %v1011, %v1135
        %v1137 = vpop.f32.mrf.mxu0
        %v1138 = vpop.f32.mrf.mxu0
        %v1139 = vadd.f32 %v1011, %v1138
        %v1140 = vpop.f32.mrf.mxu0
        %1141 = vmatprep.mubr.bf16.mxu0 0
        %1142 = vmatmul.mubr.bf16.gmra.mxu0 %v986
        %v1143 = vpop.f32.mrf.mxu0
        %v1144 = vadd.f32 %v1011, %v1143
        %v1145 = vpop.f32.mrf.mxu0
        %v1146 = vpop.f32.mrf.mxu0
        %v1147 = vadd.f32 %v1011, %v1146
        %v1148 = vpop.f32.mrf.mxu0
        %1149 = vmatprep.mubr.bf16.mxu0 0
        %1150 = vmatmul.mubr.bf16.gmra.mxu0 %v987
        %v1151 = vpop.f32.mrf.mxu0
        %v1152 = vadd.f32 %v1011, %v1151
        %v1153 = vpop.f32.mrf.mxu0
        %v1154 = vpop.f32.mrf.mxu0
        %v1155 = vadd.f32 %v1011, %v1154
        %v1156 = vpop.f32.mrf.mxu0
        %1157 = vdwg.mxu0
        %v1158 = vmul.f32 %v1096, %v759
        %v1159 = vmul.f32 %v1099, %v762
        %v1160 = vmul.f32 %v1104, %v767
        %v1161 = vmul.f32 %v1107, %v770
        %v1162 = vmul.f32 %v1112, %v775
        %v1163 = vmul.f32 %v1115, %v778
        %v1164 = vmul.f32 %v1120, %v783
        %v1165 = vmul.f32 %v1123, %v786
        %v1166 = vmul.f32 %v1128, %v791
        %v1167 = vmul.f32 %v1131, %v794
        %v1168 = vmul.f32 %v1136, %v799
        %v1169 = vmul.f32 %v1139, %v802
        %v1170 = vmul.f32 %v1144, %v807
        %v1171 = vmul.f32 %v1147, %v810
        %v1172 = vmul.f32 %v1152, %v815
        %v1173 = vmul.f32 %v1155, %v818
        %v1174 = vld [vmem:[%s320] sm:$0xf]
        %v1175 = vld [vmem:[%s320 + $0x4] sm:$0xf]
        %v1176 = vld [vmem:[%s320 + $0x8] sm:$0xf]
        %v1177 = vld [vmem:[%s320 + $0xc] sm:$0xf]
        %v1178 = vld [vmem:[%s320 + $0x10] sm:$0xf]
        %v1179 = vld [vmem:[%s320 + $0x14] sm:$0xf]
        %v1180 = vld [vmem:[%s320 + $0x18] sm:$0xf]
        %v1181 = vld [vmem:[%s320 + $0x1c] sm:$0xf]
        %s1182 = scalar_lea.vmem %s5, 128
        %v1183 = vld [vmem:[%s1182] sm:$0xf]
        %v1184 = vld [vmem:[%s1182 + $0x4] sm:$0xf]
        %v1185 = vld [vmem:[%s1182 + $0x8] sm:$0xf]
        %v1186 = vld [vmem:[%s1182 + $0xc] sm:$0xf]
        %v1187 = vld [vmem:[%s1182 + $0x10] sm:$0xf]
        %v1188 = vld [vmem:[%s1182 + $0x14] sm:$0xf]
        %v1189 = vld [vmem:[%s1182 + $0x18] sm:$0xf]
        %v1190 = vld [vmem:[%s1182 + $0x1c] sm:$0xf]
        %v1191 = vld [vmem:[%s1182 + $0x20] sm:$0xf]
        %v1192 = vld [vmem:[%s1182 + $0x24] sm:$0xf]
        %v1193 = vld [vmem:[%s1182 + $0x28] sm:$0xf]
        %v1194 = vld [vmem:[%s1182 + $0x2c] sm:$0xf]
        %v1195 = vld [vmem:[%s1182 + $0x30] sm:$0xf]
        %v1196 = vld [vmem:[%s1182 + $0x34] sm:$0xf]
        %v1197 = vld [vmem:[%s1182 + $0x38] sm:$0xf]
        %v1198 = vld [vmem:[%s1182 + $0x3c] sm:$0xf]
        %s1199 = scalar_lea.vmem %s6, 3
        %v1200 = vld [vmem:[%s1199] sm:$0x1]
        %v1202 = vlaneseq
        %v1203 = vshrl.u32 %v1202, 7
        %v1204 = vsub.s32 0, %v1203
        %v1205 = vrot.slane %v1200, %v1204
        %v1215 = vunpack.c.l.b16 %v1174
        %v1216 = vunpack.c.l.b16 %v1175
        %v1217 = vunpack.c.l.b16 %v1176
        %v1218 = vunpack.c.l.b16 %v1177
        %v1219 = vunpack.c.l.b16 %v1178
        %v1220 = vunpack.c.l.b16 %v1179
        %v1221 = vunpack.c.l.b16 %v1180
        %v1222 = vunpack.c.l.b16 %v1181
        %v1223 = vpack.c.b16 %v1216, %v1215
        %v1224 = vpack.c.b16 %v1218, %v1217
        %v1225 = vpack.c.b16 %v1220, %v1219
        %v1226 = vpack.c.b16 %v1222, %v1221
        %v1247 = vunpack.c.l.b16 %v1183
        %v1248 = vunpack.c.l.b16 %v1184
        %v1249 = vunpack.c.l.b16 %v1185
        %v1250 = vunpack.c.l.b16 %v1186
        %v1251 = vunpack.c.l.b16 %v1187
        %v1252 = vunpack.c.l.b16 %v1188
        %v1253 = vunpack.c.l.b16 %v1189
        %v1254 = vunpack.c.l.b16 %v1190
        %v1255 = vunpack.c.l.b16 %v1191
        %v1256 = vunpack.c.l.b16 %v1192
        %v1257 = vunpack.c.l.b16 %v1193
        %v1258 = vunpack.c.l.b16 %v1194
        %v1259 = vunpack.c.l.b16 %v1195
        %v1260 = vunpack.c.l.b16 %v1196
        %v1261 = vunpack.c.l.b16 %v1197
        %v1262 = vunpack.c.l.b16 %v1198
        %v1263 = vpack.c.b16 %v1248, %v1247
        %v1264 = vpack.c.b16 %v1250, %v1249
        %v1265 = vpack.c.b16 %v1252, %v1251
        %v1266 = vpack.c.b16 %v1254, %v1253
        %v1267 = vpack.c.b16 %v1256, %v1255
        %v1268 = vpack.c.b16 %v1258, %v1257
        %v1269 = vpack.c.b16 %v1260, %v1259
        %v1270 = vpack.c.b16 %v1262, %v1261
        %1279 = vmatprep.subr.bf16.mxu0 0
        %1280 = vmatpush1.bf16.msra.mxu0 %v1270
        %1281 = vmatprep.subr.bf16.mxu0 0
        %1282 = vmatpush1.bf16.msra.mxu0 %v1269
        %1283 = vmatprep.subr.bf16.mxu0 0
        %1284 = vmatpush1.bf16.msra.mxu0 %v1268
        %1285 = vmatprep.subr.bf16.mxu0 0
        %1286 = vmatpush1.bf16.msra.mxu0 %v1267
        %1287 = vmatprep.subr.bf16.mxu0 0
        %1288 = vmatpush1.bf16.msra.mxu0 %v1266
        %1289 = vmatprep.subr.bf16.mxu0 0
        %1290 = vmatpush1.bf16.msra.mxu0 %v1265
        %1291 = vmatprep.subr.bf16.mxu0 0
        %1292 = vmatpush1.bf16.msra.mxu0 %v1264
        %1293 = vmatprep.subr.bf16.mxu0 0
        %1294 = vmatpush1.bf16.msra.mxu0 %v1263
        %1295 = vmatprep.subr.bf16.mxu0 0
        %1296 = vmatpush2.bf16.msra.mxu0 0
        %1297 = vmatprep.subr.bf16.mxu0 0
        %1298 = vmatpush2.bf16.msra.mxu0 0
        %1299 = vmatprep.subr.bf16.mxu0 0
        %1300 = vmatpush2.bf16.msra.mxu0 0
        %1301 = vmatprep.subr.bf16.mxu0 0
        %1302 = vmatpush2.bf16.msra.mxu0 0
        %1303 = vmatprep.subr.bf16.mxu0 0
        %1304 = vmatpush2.bf16.msra.mxu0 0
        %1305 = vmatprep.subr.bf16.mxu0 0
        %1306 = vmatpush2.bf16.msra.mxu0 0
        %1307 = vmatprep.subr.bf16.mxu0 0
        %1308 = vmatpush2.bf16.msra.mxu0 0
        %1309 = vmatprep.subr.bf16.mxu0 0
        %1310 = vmatpush2.bf16.msra.mxu0 0
        %1311 = vmatprep.mubr.bf16.mxu0 0
        %1312 = vmatmul.mubr.bf16.gmra.mxu0 %v1223
        %v1313 = vpop.f32.mrf.mxu0
        %v1314 = vadd.f32 %v1205, %v1313
        %v1315 = vpop.f32.mrf.mxu0
        %v1316 = vpop.f32.mrf.mxu0
        %v1317 = vadd.f32 %v1205, %v1316
        %v1318 = vpop.f32.mrf.mxu0
        %1319 = vmatprep.mubr.bf16.mxu0 0
        %1320 = vmatmul.mubr.bf16.gmra.mxu0 %v1224
        %v1321 = vpop.f32.mrf.mxu0
        %v1322 = vadd.f32 %v1205, %v1321
        %v1323 = vpop.f32.mrf.mxu0
        %v1324 = vpop.f32.mrf.mxu0
        %v1325 = vadd.f32 %v1205, %v1324
        %v1326 = vpop.f32.mrf.mxu0
        %1327 = vmatprep.mubr.bf16.mxu0 0
        %1328 = vmatmul.mubr.bf16.gmra.mxu0 %v1225
        %v1329 = vpop.f32.mrf.mxu0
        %v1330 = vadd.f32 %v1205, %v1329
        %v1331 = vpop.f32.mrf.mxu0
        %v1332 = vpop.f32.mrf.mxu0
        %v1333 = vadd.f32 %v1205, %v1332
        %v1334 = vpop.f32.mrf.mxu0
        %1335 = vmatprep.mubr.bf16.mxu0 0
        %1336 = vmatmul.mubr.bf16.gmra.mxu0 %v1226
        %v1337 = vpop.f32.mrf.mxu0
        %v1338 = vadd.f32 %v1205, %v1337
        %v1339 = vpop.f32.mrf.mxu0
        %v1340 = vpop.f32.mrf.mxu0
        %v1341 = vadd.f32 %v1205, %v1340
        %v1342 = vpop.f32.mrf.mxu0
        %1343 = vdwg.mxu0
        %v1344 = vpack.c.bf16 %v1317, %v1314
        %v1345 = vpack.c.bf16 %v1325, %v1322
        %v1346 = vpack.c.bf16 %v1333, %v1330
        %v1347 = vpack.c.bf16 %v1341, %v1338
        %vm1348 = vcmask 523264
        %v1350 = vsel %vm1348, %v507, 0
        %v1353 = vsel %vm1348, %v508, 0
        %v1356 = vsel %vm1348, %v509, 0
        %v1359 = vsel %vm1348, %v510, 0
        %v1362 = vsel %vm1348, %v511, 0
        %v1365 = vsel %vm1348, %v512, 0
        %v1368 = vsel %vm1348, %v513, 0
        %v1371 = vsel %vm1348, %v514, 0
        %1373 = vmatprep.subr.bf16.mxu0 0
        %1374 = vmatpush1.bf16.msra.mxu0 0
        %1375 = vmatprep.subr.bf16.mxu0 0
        %1376 = vmatpush1.bf16.msra.mxu0 0
        %1377 = vmatprep.subr.bf16.mxu0 0
        %1378 = vmatpush1.bf16.msra.mxu0 0
        %1379 = vmatprep.subr.bf16.mxu0 0
        %1380 = vmatpush1.bf16.msra.mxu0 0
        %1381 = vmatprep.subr.bf16.mxu0 0
        %1382 = vmatpush1.bf16.msra.mxu0 %v1347
        %1383 = vmatprep.subr.bf16.mxu0 0
        %1384 = vmatpush1.bf16.msra.mxu0 %v1346
        %1385 = vmatprep.subr.bf16.mxu0 0
        %1386 = vmatpush1.bf16.msra.mxu0 %v1345
        %1387 = vmatprep.subr.bf16.mxu0 0
        %1388 = vmatpush1.bf16.msra.mxu0 %v1344
        %1389 = vmatprep.subr.bf16.mxu0 0
        %1390 = vmatpush2.bf16.msra.mxu0 0
        %1391 = vmatprep.subr.bf16.mxu0 0
        %1392 = vmatpush2.bf16.msra.mxu0 0
        %1393 = vmatprep.subr.bf16.mxu0 0
        %1394 = vmatpush2.bf16.msra.mxu0 0
        %1395 = vmatprep.subr.bf16.mxu0 0
        %1396 = vmatpush2.bf16.msra.mxu0 0
        %1397 = vmatprep.subr.bf16.mxu0 0
        %1398 = vmatpush2.bf16.msra.mxu0 0
        %1399 = vmatprep.subr.bf16.mxu0 0
        %1400 = vmatpush2.bf16.msra.mxu0 0
        %1401 = vmatprep.subr.bf16.mxu0 0
        %1402 = vmatpush2.bf16.msra.mxu0 0
        %1403 = vmatprep.subr.bf16.mxu0 0
        %1404 = vmatpush2.bf16.msra.mxu0 0
        %1405 = vmatprep.mubr.bf16.mxu0 0
        %1406 = vmatmul.mubr.bf16.gmra.mxu0 %v1350
        %v1407 = vpop.f32.mrf.mxu0
        %v1408 = vadd.f32 0.0, %v1407
        %v1409 = vpop.f32.mrf.mxu0
        %v1410 = vpop.f32.mrf.mxu0
        %v1411 = vadd.f32 0.0, %v1410
        %v1412 = vpop.f32.mrf.mxu0
        %1413 = vmatprep.mubr.bf16.mxu0 0
        %1414 = vmatmul.mubr.bf16.gmra.mxu0 %v1353
        %v1415 = vpop.f32.mrf.mxu0
        %v1416 = vadd.f32 0.0, %v1415
        %v1417 = vpop.f32.mrf.mxu0
        %v1418 = vpop.f32.mrf.mxu0
        %v1419 = vadd.f32 0.0, %v1418
        %v1420 = vpop.f32.mrf.mxu0
        %1421 = vmatprep.mubr.bf16.mxu0 0
        %1422 = vmatmul.mubr.bf16.gmra.mxu0 %v1356
        %v1423 = vpop.f32.mrf.mxu0
        %v1424 = vadd.f32 0.0, %v1423
        %v1425 = vpop.f32.mrf.mxu0
        %v1426 = vpop.f32.mrf.mxu0
        %v1427 = vadd.f32 0.0, %v1426
        %v1428 = vpop.f32.mrf.mxu0
        %1429 = vmatprep.mubr.bf16.mxu0 0
        %1430 = vmatmul.mubr.bf16.gmra.mxu0 %v1359
        %v1431 = vpop.f32.mrf.mxu0
        %v1432 = vadd.f32 0.0, %v1431
        %v1433 = vpop.f32.mrf.mxu0
        %v1434 = vpop.f32.mrf.mxu0
        %v1435 = vadd.f32 0.0, %v1434
        %v1436 = vpop.f32.mrf.mxu0
        %1437 = vmatprep.mubr.bf16.mxu0 0
        %1438 = vmatmul.mubr.bf16.gmra.mxu0 %v1362
        %v1439 = vpop.f32.mrf.mxu0
        %v1440 = vadd.f32 0.0, %v1439
        %v1441 = vpop.f32.mrf.mxu0
        %v1442 = vpop.f32.mrf.mxu0
        %v1443 = vadd.f32 0.0, %v1442
        %v1444 = vpop.f32.mrf.mxu0
        %1445 = vmatprep.mubr.bf16.mxu0 0
        %1446 = vmatmul.mubr.bf16.gmra.mxu0 %v1365
        %v1447 = vpop.f32.mrf.mxu0
        %v1448 = vadd.f32 0.0, %v1447
        %v1449 = vpop.f32.mrf.mxu0
        %v1450 = vpop.f32.mrf.mxu0
        %v1451 = vadd.f32 0.0, %v1450
        %v1452 = vpop.f32.mrf.mxu0
        %1453 = vmatprep.mubr.bf16.mxu0 0
        %1454 = vmatmul.mubr.bf16.gmra.mxu0 %v1368
        %v1455 = vpop.f32.mrf.mxu0
        %v1456 = vadd.f32 0.0, %v1455
        %v1457 = vpop.f32.mrf.mxu0
        %v1458 = vpop.f32.mrf.mxu0
        %v1459 = vadd.f32 0.0, %v1458
        %v1460 = vpop.f32.mrf.mxu0
        %1461 = vmatprep.mubr.bf16.mxu0 0
        %1462 = vmatmul.mubr.bf16.gmra.mxu0 %v1371
        %v1463 = vpop.f32.mrf.mxu0
        %v1464 = vadd.f32 0.0, %v1463
        %v1465 = vpop.f32.mrf.mxu0
        %v1466 = vpop.f32.mrf.mxu0
        %v1467 = vadd.f32 0.0, %v1466
        %v1468 = vpop.f32.mrf.mxu0
        %1469 = vdwg.mxu0
        %v1470 = vmul.f32 %v1408, %v1158
        %v1471 = vmul.f32 %v1411, %v1159
        %v1472 = vmul.f32 %v1416, %v1160
        %v1473 = vmul.f32 %v1419, %v1161
        %v1474 = vmul.f32 %v1424, %v1162
        %v1475 = vmul.f32 %v1427, %v1163
        %v1476 = vmul.f32 %v1432, %v1164
        %v1477 = vmul.f32 %v1435, %v1165
        %v1478 = vmul.f32 %v1440, %v1166
        %v1479 = vmul.f32 %v1443, %v1167
        %v1480 = vmul.f32 %v1448, %v1168
        %v1481 = vmul.f32 %v1451, %v1169
        %v1482 = vmul.f32 %v1456, %v1170
        %v1483 = vmul.f32 %v1459, %v1171
        %v1484 = vmul.f32 %v1464, %v1172
        %v1485 = vmul.f32 %v1467, %v1173
        %v1486 = vpack.c.bf16 %v1471, %v1470
        %v1487 = vpack.c.bf16 %v1473, %v1472
        %v1488 = vpack.c.bf16 %v1475, %v1474
        %v1489 = vpack.c.bf16 %v1477, %v1476
        %v1490 = vpack.c.bf16 %v1479, %v1478
        %v1491 = vpack.c.bf16 %v1481, %v1480
        %v1492 = vpack.c.bf16 %v1483, %v1482
        %v1493 = vpack.c.bf16 %v1485, %v1484
        %1494 = vmatprep.subr.bf16.mxu0 0
        %1495 = vmatpush1.bf16.msra.mxu0 %v1493
        %1496 = vmatprep.subr.bf16.mxu0 0
        %1497 = vmatpush1.bf16.msra.mxu0 %v1492
        %1498 = vmatprep.subr.bf16.mxu0 0
        %1499 = vmatpush1.bf16.msra.mxu0 %v1491
        %1500 = vmatprep.subr.bf16.mxu0 0
        %1501 = vmatpush1.bf16.msra.mxu0 %v1490
        %1502 = vmatprep.subr.bf16.mxu0 0
        %1503 = vmatpush1.bf16.msra.mxu0 %v1489
        %1504 = vmatprep.subr.bf16.mxu0 0
        %1505 = vmatpush1.bf16.msra.mxu0 %v1488
        %1506 = vmatprep.subr.bf16.mxu0 0
        %1507 = vmatpush1.bf16.msra.mxu0 %v1487
        %1508 = vmatprep.subr.bf16.mxu0 0
        %1509 = vmatpush1.bf16.msra.mxu0 %v1486
        %1510 = vmatprep.subr.bf16.mxu0 0
        %1511 = vmatpush2.bf16.msra.mxu0 0
        %1512 = vmatprep.subr.bf16.mxu0 0
        %1513 = vmatpush2.bf16.msra.mxu0 0
        %1514 = vmatprep.subr.bf16.mxu0 0
        %1515 = vmatpush2.bf16.msra.mxu0 0
        %1516 = vmatprep.subr.bf16.mxu0 0
        %1517 = vmatpush2.bf16.msra.mxu0 0
        %1518 = vmatprep.subr.bf16.mxu0 0
        %1519 = vmatpush2.bf16.msra.mxu0 0
        %1520 = vmatprep.subr.bf16.mxu0 0
        %1521 = vmatpush2.bf16.msra.mxu0 0
        %1522 = vmatprep.subr.bf16.mxu0 0
        %1523 = vmatpush2.bf16.msra.mxu0 0
        %1524 = vmatprep.subr.bf16.mxu0 0
        %1525 = vmatpush2.bf16.msra.mxu0 0
        %1526 = vmatprep.mubr.bf16.mxu0 0
        %1527 = vmatmul.mubr.bf16.gmra.mxu0 %v552
        %v1528 = vpop.f32.mrf.mxu0
        %v1529 = vadd.f32 0.0, %v1528
        %v1530 = vpop.f32.mrf.mxu0
        %v1531 = vpop.f32.mrf.mxu0
        %v1532 = vadd.f32 0.0, %v1531
        %v1533 = vpop.f32.mrf.mxu0
        %1534 = vmatprep.mubr.bf16.mxu0 0
        %1535 = vmatmul.mubr.bf16.gmra.mxu0 %v553
        %v1536 = vpop.f32.mrf.mxu0
        %v1537 = vadd.f32 0.0, %v1536
        %v1538 = vpop.f32.mrf.mxu0
        %v1539 = vpop.f32.mrf.mxu0
        %v1540 = vadd.f32 0.0, %v1539
        %v1541 = vpop.f32.mrf.mxu0
        %1542 = vmatprep.mubr.bf16.mxu0 0
        %1543 = vmatmul.mubr.bf16.gmra.mxu0 %v554
        %v1544 = vpop.f32.mrf.mxu0
        %v1545 = vadd.f32 0.0, %v1544
        %v1546 = vpop.f32.mrf.mxu0
        %v1547 = vpop.f32.mrf.mxu0
        %v1548 = vadd.f32 0.0, %v1547
        %v1549 = vpop.f32.mrf.mxu0
        %1550 = vmatprep.mubr.bf16.mxu0 0
        %1551 = vmatmul.mubr.bf16.gmra.mxu0 %v555
        %v1552 = vpop.f32.mrf.mxu0
        %v1553 = vadd.f32 0.0, %v1552
        %v1554 = vpop.f32.mrf.mxu0
        %v1555 = vpop.f32.mrf.mxu0
        %v1556 = vadd.f32 0.0, %v1555
        %v1557 = vpop.f32.mrf.mxu0
        %1558 = vdwg.mxu0
        %v1559 = vadd.f32 %v1314, %v1529
        %v1560 = vadd.f32 %v1317, %v1532
        %v1561 = vadd.f32 %v1322, %v1537
        %v1562 = vadd.f32 %v1325, %v1540
        %v1563 = vadd.f32 %v1330, %v1545
        %v1564 = vadd.f32 %v1333, %v1548
        %v1565 = vadd.f32 %v1338, %v1553
        %v1566 = vadd.f32 %v1341, %v1556
        %v1567 = vpack.c.bf16 %v1560, %v1559
        %v1568 = vpack.c.bf16 %v1562, %v1561
        %v1569 = vpack.c.bf16 %v1564, %v1563
        %v1570 = vpack.c.bf16 %v1566, %v1565
        %s1571 = scalar_lea.vmem %s5, 192
        %v1572 = vld [vmem:[%s1571] sm:$0xf]
        %v1573 = vld [vmem:[%s1571 + $0x4] sm:$0xf]
        %v1574 = vld [vmem:[%s1571 + $0x8] sm:$0xf]
        %v1575 = vld [vmem:[%s1571 + $0xc] sm:$0xf]
        %v1576 = vld [vmem:[%s1571 + $0x10] sm:$0xf]
        %v1577 = vld [vmem:[%s1571 + $0x14] sm:$0xf]
        %v1578 = vld [vmem:[%s1571 + $0x18] sm:$0xf]
        %v1579 = vld [vmem:[%s1571 + $0x1c] sm:$0xf]
        %v1580 = vld [vmem:[%s1571 + $0x20] sm:$0xf]
        %v1581 = vld [vmem:[%s1571 + $0x24] sm:$0xf]
        %v1582 = vld [vmem:[%s1571 + $0x28] sm:$0xf]
        %v1583 = vld [vmem:[%s1571 + $0x2c] sm:$0xf]
        %v1584 = vld [vmem:[%s1571 + $0x30] sm:$0xf]
        %v1585 = vld [vmem:[%s1571 + $0x34] sm:$0xf]
        %v1586 = vld [vmem:[%s1571 + $0x38] sm:$0xf]
        %v1587 = vld [vmem:[%s1571 + $0x3c] sm:$0xf]
        %s1588 = scalar_lea.vmem %s6, 4
        %v1589 = vld [vmem:[%s1588] sm:$0x1]
        %v1591 = vlaneseq
        %v1592 = vshrl.u32 %v1591, 7
        %v1593 = vsub.s32 0, %v1592
        %v1594 = vrot.slane %v1589, %v1593
        %v1612 = vunpack.c.l.b16 %v1572
        %v1613 = vunpack.c.l.b16 %v1573
        %v1614 = vunpack.c.l.b16 %v1574
        %v1615 = vunpack.c.l.b16 %v1575
        %v1616 = vunpack.c.l.b16 %v1576
        %v1617 = vunpack.c.l.b16 %v1577
        %v1618 = vunpack.c.l.b16 %v1578
        %v1619 = vunpack.c.l.b16 %v1579
        %v1620 = vunpack.c.l.b16 %v1580
        %v1621 = vunpack.c.l.b16 %v1581
        %v1622 = vunpack.c.l.b16 %v1582
        %v1623 = vunpack.c.l.b16 %v1583
        %v1624 = vunpack.c.l.b16 %v1584
        %v1625 = vunpack.c.l.b16 %v1585
        %v1626 = vunpack.c.l.b16 %v1586
        %v1627 = vunpack.c.l.b16 %v1587
        %v1628 = vpack.c.b16 %v1613, %v1612
        %v1629 = vpack.c.b16 %v1615, %v1614
        %v1630 = vpack.c.b16 %v1617, %v1616
        %v1631 = vpack.c.b16 %v1619, %v1618
        %v1632 = vpack.c.b16 %v1621, %v1620
        %v1633 = vpack.c.b16 %v1623, %v1622
        %v1634 = vpack.c.b16 %v1625, %v1624
        %v1635 = vpack.c.b16 %v1627, %v1626
        %1644 = vmatprep.subr.bf16.mxu0 0
        %1645 = vmatpush1.bf16.msra.mxu0 %v1635
        %1646 = vmatprep.subr.bf16.mxu0 0
        %1647 = vmatpush1.bf16.msra.mxu0 %v1634
        %1648 = vmatprep.subr.bf16.mxu0 0
        %1649 = vmatpush1.bf16.msra.mxu0 %v1633
        %1650 = vmatprep.subr.bf16.mxu0 0
        %1651 = vmatpush1.bf16.msra.mxu0 %v1632
        %1652 = vmatprep.subr.bf16.mxu0 0
        %1653 = vmatpush1.bf16.msra.mxu0 %v1631
        %1654 = vmatprep.subr.bf16.mxu0 0
        %1655 = vmatpush1.bf16.msra.mxu0 %v1630
        %1656 = vmatprep.subr.bf16.mxu0 0
        %1657 = vmatpush1.bf16.msra.mxu0 %v1629
        %1658 = vmatprep.subr.bf16.mxu0 0
        %1659 = vmatpush1.bf16.msra.mxu0 %v1628
        %1660 = vmatprep.subr.bf16.mxu0 0
        %1661 = vmatpush2.bf16.msra.mxu0 0
        %1662 = vmatprep.subr.bf16.mxu0 0
        %1663 = vmatpush2.bf16.msra.mxu0 0
        %1664 = vmatprep.subr.bf16.mxu0 0
        %1665 = vmatpush2.bf16.msra.mxu0 0
        %1666 = vmatprep.subr.bf16.mxu0 0
        %1667 = vmatpush2.bf16.msra.mxu0 0
        %1668 = vmatprep.subr.bf16.mxu0 0
        %1669 = vmatpush2.bf16.msra.mxu0 0
        %1670 = vmatprep.subr.bf16.mxu0 0
        %1671 = vmatpush2.bf16.msra.mxu0 0
        %1672 = vmatprep.subr.bf16.mxu0 0
        %1673 = vmatpush2.bf16.msra.mxu0 0
        %1674 = vmatprep.subr.bf16.mxu0 0
        %1675 = vmatpush2.bf16.msra.mxu0 0
        %1676 = vmatprep.mubr.bf16.mxu0 0
        %1677 = vmatmul.mubr.bf16.gmra.mxu0 %v1567
        %v1678 = vpop.f32.mrf.mxu0
        %v1679 = vadd.f32 %v1594, %v1678
        %v1680 = vpop.f32.mrf.mxu0
        %v1681 = vpop.f32.mrf.mxu0
        %v1682 = vadd.f32 %v1594, %v1681
        %v1683 = vpop.f32.mrf.mxu0
        %1684 = vmatprep.mubr.bf16.mxu0 0
        %1685 = vmatmul.mubr.bf16.gmra.mxu0 %v1568
        %v1686 = vpop.f32.mrf.mxu0
        %v1687 = vadd.f32 %v1594, %v1686
        %v1688 = vpop.f32.mrf.mxu0
        %v1689 = vpop.f32.mrf.mxu0
        %v1690 = vadd.f32 %v1594, %v1689
        %v1691 = vpop.f32.mrf.mxu0
        %1692 = vmatprep.mubr.bf16.mxu0 0
        %1693 = vmatmul.mubr.bf16.gmra.mxu0 %v1569
        %v1694 = vpop.f32.mrf.mxu0
        %v1695 = vadd.f32 %v1594, %v1694
        %v1696 = vpop.f32.mrf.mxu0
        %v1697 = vpop.f32.mrf.mxu0
        %v1698 = vadd.f32 %v1594, %v1697
        %v1699 = vpop.f32.mrf.mxu0
        %1700 = vmatprep.mubr.bf16.mxu0 0
        %1701 = vmatmul.mubr.bf16.gmra.mxu0 %v1570
        %v1702 = vpop.f32.mrf.mxu0
        %v1703 = vadd.f32 %v1594, %v1702
        %v1704 = vpop.f32.mrf.mxu0
        %v1705 = vpop.f32.mrf.mxu0
        %v1706 = vadd.f32 %v1594, %v1705
        %v1707 = vpop.f32.mrf.mxu0
        %1708 = vdwg.mxu0
        %v1709 = vmax.f32 %v1679, 0.0
        %v1710 = vmax.f32 %v1682, 0.0
        %v1711 = vmax.f32 %v1687, 0.0
        %v1712 = vmax.f32 %v1690, 0.0
        %v1713 = vmax.f32 %v1695, 0.0
        %v1714 = vmax.f32 %v1698, 0.0
        %v1715 = vmax.f32 %v1703, 0.0
        %v1716 = vmax.f32 %v1706, 0.0
        %v1717 = vadd.f32 %v1709, %v1314
        %v1718 = vadd.f32 %v1710, %v1317
        %v1719 = vadd.f32 %v1711, %v1322
        %v1720 = vadd.f32 %v1712, %v1325
        %v1721 = vadd.f32 %v1713, %v1330
        %v1722 = vadd.f32 %v1714, %v1333
        %v1723 = vadd.f32 %v1715, %v1338
        %v1724 = vadd.f32 %v1716, %v1341
        %v1725 = vpack.c.bf16 %v1718, %v1717
        %v1726 = vpack.c.bf16 %v1720, %v1719
        %v1727 = vpack.c.bf16 %v1722, %v1721
        %v1728 = vpack.c.bf16 %v1724, %v1723
        %1729 = vmatprep.subr.bf16.mxu0 0
        %1730 = vmatpush1.bf16.msra.mxu0 0
        %1731 = vmatprep.subr.bf16.mxu0 0
        %1732 = vmatpush1.bf16.msra.mxu0 0
        %1733 = vmatprep.subr.bf16.mxu0 0
        %1734 = vmatpush1.bf16.msra.mxu0 0
        %1735 = vmatprep.subr.bf16.mxu0 0
        %1736 = vmatpush1.bf16.msra.mxu0 0
        %1737 = vmatprep.subr.bf16.mxu0 0
        %1738 = vmatpush1.bf16.msra.mxu0 %v1728
        %1739 = vmatprep.subr.bf16.mxu0 0
        %1740 = vmatpush1.bf16.msra.mxu0 %v1727
        %1741 = vmatprep.subr.bf16.mxu0 0
        %1742 = vmatpush1.bf16.msra.mxu0 %v1726
        %1743 = vmatprep.subr.bf16.mxu0 0
        %1744 = vmatpush1.bf16.msra.mxu0 %v1725
        %1745 = vmatprep.subr.bf16.mxu0 0
        %1746 = vmatpush2.bf16.msra.mxu0 0
        %1747 = vmatprep.subr.bf16.mxu0 0
        %1748 = vmatpush2.bf16.msra.mxu0 0
        %1749 = vmatprep.subr.bf16.mxu0 0
        %1750 = vmatpush2.bf16.msra.mxu0 0
        %1751 = vmatprep.subr.bf16.mxu0 0
        %1752 = vmatpush2.bf16.msra.mxu0 0
        %1753 = vmatprep.subr.bf16.mxu0 0
        %1754 = vmatpush2.bf16.msra.mxu0 0
        %1755 = vmatprep.subr.bf16.mxu0 0
        %1756 = vmatpush2.bf16.msra.mxu0 0
        %1757 = vmatprep.subr.bf16.mxu0 0
        %1758 = vmatpush2.bf16.msra.mxu0 0
        %1759 = vmatprep.subr.bf16.mxu0 0
        %1760 = vmatpush2.bf16.msra.mxu0 0
        %1761 = vmatprep.mubr.bf16.mxu0 0
        %1762 = vmatmul.mubr.bf16.gmra.mxu0 %v1350
        %v1763 = vpop.f32.mrf.mxu0
        %v1764 = vadd.f32 0.0, %v1763
        %v1765 = vpop.f32.mrf.mxu0
        %v1766 = vpop.f32.mrf.mxu0
        %v1767 = vadd.f32 0.0, %v1766
        %v1768 = vpop.f32.mrf.mxu0
        %1769 = vmatprep.mubr.bf16.mxu0 0
        %1770 = vmatmul.mubr.bf16.gmra.mxu0 %v1353
        %v1771 = vpop.f32.mrf.mxu0
        %v1772 = vadd.f32 0.0, %v1771
        %v1773 = vpop.f32.mrf.mxu0
        %v1774 = vpop.f32.mrf.mxu0
        %v1775 = vadd.f32 0.0, %v1774
        %v1776 = vpop.f32.mrf.mxu0
        %1777 = vmatprep.mubr.bf16.mxu0 0
        %1778 = vmatmul.mubr.bf16.gmra.mxu0 %v1356
        %v1779 = vpop.f32.mrf.mxu0
        %v1780 = vadd.f32 0.0, %v1779
        %v1781 = vpop.f32.mrf.mxu0
        %v1782 = vpop.f32.mrf.mxu0
        %v1783 = vadd.f32 0.0, %v1782
        %v1784 = vpop.f32.mrf.mxu0
        %1785 = vmatprep.mubr.bf16.mxu0 0
        %1786 = vmatmul.mubr.bf16.gmra.mxu0 %v1359
        %v1787 = vpop.f32.mrf.mxu0
        %v1788 = vadd.f32 0.0, %v1787
        %v1789 = vpop.f32.mrf.mxu0
        %v1790 = vpop.f32.mrf.mxu0
        %v1791 = vadd.f32 0.0, %v1790
        %v1792 = vpop.f32.mrf.mxu0
        %1793 = vmatprep.mubr.bf16.mxu0 0
        %1794 = vmatmul.mubr.bf16.gmra.mxu0 %v1362
        %v1795 = vpop.f32.mrf.mxu0
        %v1796 = vadd.f32 0.0, %v1795
        %v1797 = vpop.f32.mrf.mxu0
        %v1798 = vpop.f32.mrf.mxu0
        %v1799 = vadd.f32 0.0, %v1798
        %v1800 = vpop.f32.mrf.mxu0
        %1801 = vmatprep.mubr.bf16.mxu0 0
        %1802 = vmatmul.mubr.bf16.gmra.mxu0 %v1365
        %v1803 = vpop.f32.mrf.mxu0
        %v1804 = vadd.f32 0.0, %v1803
        %v1805 = vpop.f32.mrf.mxu0
        %v1806 = vpop.f32.mrf.mxu0
        %v1807 = vadd.f32 0.0, %v1806
        %v1808 = vpop.f32.mrf.mxu0
        %1809 = vmatprep.mubr.bf16.mxu0 0
        %1810 = vmatmul.mubr.bf16.gmra.mxu0 %v1368
        %v1811 = vpop.f32.mrf.mxu0
        %v1812 = vadd.f32 0.0, %v1811
        %v1813 = vpop.f32.mrf.mxu0
        %v1814 = vpop.f32.mrf.mxu0
        %v1815 = vadd.f32 0.0, %v1814
        %v1816 = vpop.f32.mrf.mxu0
        %1817 = vmatprep.mubr.bf16.mxu0 0
        %1818 = vmatmul.mubr.bf16.gmra.mxu0 %v1371
        %v1819 = vpop.f32.mrf.mxu0
        %v1820 = vadd.f32 0.0, %v1819
        %v1821 = vpop.f32.mrf.mxu0
        %v1822 = vpop.f32.mrf.mxu0
        %v1823 = vadd.f32 0.0, %v1822
        %v1824 = vpop.f32.mrf.mxu0
        %1825 = vdwg.mxu0
        %v1826 = vmul.f32 %v1764, %v1158
        %v1827 = vmul.f32 %v1767, %v1159
        %v1828 = vmul.f32 %v1772, %v1160
        %v1829 = vmul.f32 %v1775, %v1161
        %v1830 = vmul.f32 %v1780, %v1162
        %v1831 = vmul.f32 %v1783, %v1163
        %v1832 = vmul.f32 %v1788, %v1164
        %v1833 = vmul.f32 %v1791, %v1165
        %v1834 = vmul.f32 %v1796, %v1166
        %v1835 = vmul.f32 %v1799, %v1167
        %v1836 = vmul.f32 %v1804, %v1168
        %v1837 = vmul.f32 %v1807, %v1169
        %v1838 = vmul.f32 %v1812, %v1170
        %v1839 = vmul.f32 %v1815, %v1171
        %v1840 = vmul.f32 %v1820, %v1172
        %v1841 = vmul.f32 %v1823, %v1173
        %v1842 = vpack.c.bf16 %v1827, %v1826
        %v1843 = vpack.c.bf16 %v1829, %v1828
        %v1844 = vpack.c.bf16 %v1831, %v1830
        %v1845 = vpack.c.bf16 %v1833, %v1832
        %v1846 = vpack.c.bf16 %v1835, %v1834
        %v1847 = vpack.c.bf16 %v1837, %v1836
        %v1848 = vpack.c.bf16 %v1839, %v1838
        %v1849 = vpack.c.bf16 %v1841, %v1840
        %1850 = vmatprep.subr.bf16.mxu0 0
        %1851 = vmatpush1.bf16.msra.mxu0 %v1849
        %1852 = vmatprep.subr.bf16.mxu0 0
        %1853 = vmatpush1.bf16.msra.mxu0 %v1848
        %1854 = vmatprep.subr.bf16.mxu0 0
        %1855 = vmatpush1.bf16.msra.mxu0 %v1847
        %1856 = vmatprep.subr.bf16.mxu0 0
        %1857 = vmatpush1.bf16.msra.mxu0 %v1846
        %1858 = vmatprep.subr.bf16.mxu0 0
        %1859 = vmatpush1.bf16.msra.mxu0 %v1845
        %1860 = vmatprep.subr.bf16.mxu0 0
        %1861 = vmatpush1.bf16.msra.mxu0 %v1844
        %1862 = vmatprep.subr.bf16.mxu0 0
        %1863 = vmatpush1.bf16.msra.mxu0 %v1843
        %1864 = vmatprep.subr.bf16.mxu0 0
        %1865 = vmatpush1.bf16.msra.mxu0 %v1842
        %1866 = vmatprep.subr.bf16.mxu0 0
        %1867 = vmatpush2.bf16.msra.mxu0 0
        %1868 = vmatprep.subr.bf16.mxu0 0
        %1869 = vmatpush2.bf16.msra.mxu0 0
        %1870 = vmatprep.subr.bf16.mxu0 0
        %1871 = vmatpush2.bf16.msra.mxu0 0
        %1872 = vmatprep.subr.bf16.mxu0 0
        %1873 = vmatpush2.bf16.msra.mxu0 0
        %1874 = vmatprep.subr.bf16.mxu0 0
        %1875 = vmatpush2.bf16.msra.mxu0 0
        %1876 = vmatprep.subr.bf16.mxu0 0
        %1877 = vmatpush2.bf16.msra.mxu0 0
        %1878 = vmatprep.subr.bf16.mxu0 0
        %1879 = vmatpush2.bf16.msra.mxu0 0
        %1880 = vmatprep.subr.bf16.mxu0 0
        %1881 = vmatpush2.bf16.msra.mxu0 0
        %1882 = vmatprep.mubr.bf16.mxu0 0
        %1883 = vmatmul.mubr.bf16.gmra.mxu0 %v552
        %v1884 = vpop.f32.mrf.mxu0
        %v1885 = vadd.f32 0.0, %v1884
        %v1886 = vpop.f32.mrf.mxu0
        %v1887 = vpop.f32.mrf.mxu0
        %v1888 = vadd.f32 0.0, %v1887
        %v1889 = vpop.f32.mrf.mxu0
        %1890 = vmatprep.mubr.bf16.mxu0 0
        %1891 = vmatmul.mubr.bf16.gmra.mxu0 %v553
        %v1892 = vpop.f32.mrf.mxu0
        %v1893 = vadd.f32 0.0, %v1892
        %v1894 = vpop.f32.mrf.mxu0
        %v1895 = vpop.f32.mrf.mxu0
        %v1896 = vadd.f32 0.0, %v1895
        %v1897 = vpop.f32.mrf.mxu0
        %1898 = vmatprep.mubr.bf16.mxu0 0
        %1899 = vmatmul.mubr.bf16.gmra.mxu0 %v554
        %v1900 = vpop.f32.mrf.mxu0
        %v1901 = vadd.f32 0.0, %v1900
        %v1902 = vpop.f32.mrf.mxu0
        %v1903 = vpop.f32.mrf.mxu0
        %v1904 = vadd.f32 0.0, %v1903
        %v1905 = vpop.f32.mrf.mxu0
        %1906 = vmatprep.mubr.bf16.mxu0 0
        %1907 = vmatmul.mubr.bf16.gmra.mxu0 %v555
        %v1908 = vpop.f32.mrf.mxu0
        %v1909 = vadd.f32 0.0, %v1908
        %v1910 = vpop.f32.mrf.mxu0
        %v1911 = vpop.f32.mrf.mxu0
        %v1912 = vadd.f32 0.0, %v1911
        %v1913 = vpop.f32.mrf.mxu0
        %1914 = vdwg.mxu0
        %v1915 = vadd.f32 %v1717, %v1885
        %v1916 = vadd.f32 %v1718, %v1888
        %v1917 = vadd.f32 %v1719, %v1893
        %v1918 = vadd.f32 %v1720, %v1896
        %v1919 = vadd.f32 %v1721, %v1901
        %v1920 = vadd.f32 %v1722, %v1904
        %v1921 = vadd.f32 %v1723, %v1909
        %v1922 = vadd.f32 %v1724, %v1912
        %v1923 = vpack.c.bf16 %v1916, %v1915
        %v1924 = vpack.c.bf16 %v1918, %v1917
        %v1925 = vpack.c.bf16 %v1920, %v1919
        %v1926 = vpack.c.bf16 %v1922, %v1921
        %s1927 = scalar_lea.vmem %s5, 256
        %v1928 = vld [vmem:[%s1927] sm:$0xf]
        %v1929 = vld [vmem:[%s1927 + $0x4] sm:$0xf]
        %v1930 = vld [vmem:[%s1927 + $0x8] sm:$0xf]
        %v1931 = vld [vmem:[%s1927 + $0xc] sm:$0xf]
        %v1932 = vld [vmem:[%s1927 + $0x10] sm:$0xf]
        %v1933 = vld [vmem:[%s1927 + $0x14] sm:$0xf]
        %v1934 = vld [vmem:[%s1927 + $0x18] sm:$0xf]
        %v1935 = vld [vmem:[%s1927 + $0x1c] sm:$0xf]
        %v1936 = vld [vmem:[%s1927 + $0x20] sm:$0xf]
        %v1937 = vld [vmem:[%s1927 + $0x24] sm:$0xf]
        %v1938 = vld [vmem:[%s1927 + $0x28] sm:$0xf]
        %v1939 = vld [vmem:[%s1927 + $0x2c] sm:$0xf]
        %v1940 = vld [vmem:[%s1927 + $0x30] sm:$0xf]
        %v1941 = vld [vmem:[%s1927 + $0x34] sm:$0xf]
        %v1942 = vld [vmem:[%s1927 + $0x38] sm:$0xf]
        %v1943 = vld [vmem:[%s1927 + $0x3c] sm:$0xf]
        %s1944 = scalar_lea.vmem %s6, 5
        %v1945 = vld [vmem:[%s1944] sm:$0x1]
        %v1947 = vlaneseq
        %v1948 = vshrl.u32 %v1947, 7
        %v1949 = vsub.s32 0, %v1948
        %v1950 = vrot.slane %v1945, %v1949
        %v1968 = vunpack.c.l.b16 %v1928
        %v1969 = vunpack.c.l.b16 %v1929
        %v1970 = vunpack.c.l.b16 %v1930
        %v1971 = vunpack.c.l.b16 %v1931
        %v1972 = vunpack.c.l.b16 %v1932
        %v1973 = vunpack.c.l.b16 %v1933
        %v1974 = vunpack.c.l.b16 %v1934
        %v1975 = vunpack.c.l.b16 %v1935
        %v1976 = vunpack.c.l.b16 %v1936
        %v1977 = vunpack.c.l.b16 %v1937
        %v1978 = vunpack.c.l.b16 %v1938
        %v1979 = vunpack.c.l.b16 %v1939
        %v1980 = vunpack.c.l.b16 %v1940
        %v1981 = vunpack.c.l.b16 %v1941
        %v1982 = vunpack.c.l.b16 %v1942
        %v1983 = vunpack.c.l.b16 %v1943
        %v1984 = vpack.c.b16 %v1969, %v1968
        %v1985 = vpack.c.b16 %v1971, %v1970
        %v1986 = vpack.c.b16 %v1973, %v1972
        %v1987 = vpack.c.b16 %v1975, %v1974
        %v1988 = vpack.c.b16 %v1977, %v1976
        %v1989 = vpack.c.b16 %v1979, %v1978
        %v1990 = vpack.c.b16 %v1981, %v1980
        %v1991 = vpack.c.b16 %v1983, %v1982
        %2000 = vmatprep.subr.bf16.mxu0 0
        %2001 = vmatpush1.bf16.msra.mxu0 %v1991
        %2002 = vmatprep.subr.bf16.mxu0 0
        %2003 = vmatpush1.bf16.msra.mxu0 %v1990
        %2004 = vmatprep.subr.bf16.mxu0 0
        %2005 = vmatpush1.bf16.msra.mxu0 %v1989
        %2006 = vmatprep.subr.bf16.mxu0 0
        %2007 = vmatpush1.bf16.msra.mxu0 %v1988
        %2008 = vmatprep.subr.bf16.mxu0 0
        %2009 = vmatpush1.bf16.msra.mxu0 %v1987
        %2010 = vmatprep.subr.bf16.mxu0 0
        %2011 = vmatpush1.bf16.msra.mxu0 %v1986
        %2012 = vmatprep.subr.bf16.mxu0 0
        %2013 = vmatpush1.bf16.msra.mxu0 %v1985
        %2014 = vmatprep.subr.bf16.mxu0 0
        %2015 = vmatpush1.bf16.msra.mxu0 %v1984
        %2016 = vmatprep.subr.bf16.mxu0 0
        %2017 = vmatpush2.bf16.msra.mxu0 0
        %2018 = vmatprep.subr.bf16.mxu0 0
        %2019 = vmatpush2.bf16.msra.mxu0 0
        %2020 = vmatprep.subr.bf16.mxu0 0
        %2021 = vmatpush2.bf16.msra.mxu0 0
        %2022 = vmatprep.subr.bf16.mxu0 0
        %2023 = vmatpush2.bf16.msra.mxu0 0
        %2024 = vmatprep.subr.bf16.mxu0 0
        %2025 = vmatpush2.bf16.msra.mxu0 0
        %2026 = vmatprep.subr.bf16.mxu0 0
        %2027 = vmatpush2.bf16.msra.mxu0 0
        %2028 = vmatprep.subr.bf16.mxu0 0
        %2029 = vmatpush2.bf16.msra.mxu0 0
        %2030 = vmatprep.subr.bf16.mxu0 0
        %2031 = vmatpush2.bf16.msra.mxu0 0
        %2032 = vmatprep.mubr.bf16.mxu0 0
        %2033 = vmatmul.mubr.bf16.gmra.mxu0 %v1923
        %v2034 = vpop.f32.mrf.mxu0
        %v2035 = vadd.f32 %v1950, %v2034
        %v2036 = vpop.f32.mrf.mxu0
        %v2037 = vpop.f32.mrf.mxu0
        %v2038 = vadd.f32 %v1950, %v2037
        %v2039 = vpop.f32.mrf.mxu0
        %2040 = vmatprep.mubr.bf16.mxu0 0
        %2041 = vmatmul.mubr.bf16.gmra.mxu0 %v1924
        %v2042 = vpop.f32.mrf.mxu0
        %v2043 = vadd.f32 %v1950, %v2042
        %v2044 = vpop.f32.mrf.mxu0
        %v2045 = vpop.f32.mrf.mxu0
        %v2046 = vadd.f32 %v1950, %v2045
        %v2047 = vpop.f32.mrf.mxu0
        %2048 = vmatprep.mubr.bf16.mxu0 0
        %2049 = vmatmul.mubr.bf16.gmra.mxu0 %v1925
        %v2050 = vpop.f32.mrf.mxu0
        %v2051 = vadd.f32 %v1950, %v2050
        %v2052 = vpop.f32.mrf.mxu0
        %v2053 = vpop.f32.mrf.mxu0
        %v2054 = vadd.f32 %v1950, %v2053
        %v2055 = vpop.f32.mrf.mxu0
        %2056 = vmatprep.mubr.bf16.mxu0 0
        %2057 = vmatmul.mubr.bf16.gmra.mxu0 %v1926
        %v2058 = vpop.f32.mrf.mxu0
        %v2059 = vadd.f32 %v1950, %v2058
        %v2060 = vpop.f32.mrf.mxu0
        %v2061 = vpop.f32.mrf.mxu0
        %v2062 = vadd.f32 %v1950, %v2061
        %v2063 = vpop.f32.mrf.mxu0
        %2064 = vdwg.mxu0
        %v2065 = vmax.f32 %v2035, 0.0
        %v2066 = vmax.f32 %v2038, 0.0
        %v2067 = vmax.f32 %v2043, 0.0
        %v2068 = vmax.f32 %v2046, 0.0
        %v2069 = vmax.f32 %v2051, 0.0
        %v2070 = vmax.f32 %v2054, 0.0
        %v2071 = vmax.f32 %v2059, 0.0
        %v2072 = vmax.f32 %v2062, 0.0
        %v2073 = vadd.f32 %v2065, %v1717
        %v2074 = vadd.f32 %v2066, %v1718
        %v2075 = vadd.f32 %v2067, %v1719
        %v2076 = vadd.f32 %v2068, %v1720
        %v2077 = vadd.f32 %v2069, %v1721
        %v2078 = vadd.f32 %v2070, %v1722
        %v2079 = vadd.f32 %v2071, %v1723
        %v2080 = vadd.f32 %v2072, %v1724
        %v2081 = vpack.c.bf16 %v2074, %v2073
        %v2082 = vpack.c.bf16 %v2076, %v2075
        %v2083 = vpack.c.bf16 %v2078, %v2077
        %v2084 = vpack.c.bf16 %v2080, %v2079
        %s2085 = scalar_lea.vmem %s5, 320
        %v2086 = vld [vmem:[%s2085] sm:$0xf]
        %v2087 = vld [vmem:[%s2085 + $0x4] sm:$0xf]
        %v2088 = vld [vmem:[%s2085 + $0x8] sm:$0xf]
        %v2089 = vld [vmem:[%s2085 + $0xc] sm:$0xf]
        %v2090 = vld [vmem:[%s2085 + $0x10] sm:$0xf]
        %v2091 = vld [vmem:[%s2085 + $0x14] sm:$0xf]
        %v2092 = vld [vmem:[%s2085 + $0x18] sm:$0xf]
        %v2093 = vld [vmem:[%s2085 + $0x1c] sm:$0xf]
        %v2094 = vld [vmem:[%s2085 + $0x20] sm:$0xf]
        %v2095 = vld [vmem:[%s2085 + $0x24] sm:$0xf]
        %v2096 = vld [vmem:[%s2085 + $0x28] sm:$0xf]
        %v2097 = vld [vmem:[%s2085 + $0x2c] sm:$0xf]
        %v2098 = vld [vmem:[%s2085 + $0x30] sm:$0xf]
        %v2099 = vld [vmem:[%s2085 + $0x34] sm:$0xf]
        %v2100 = vld [vmem:[%s2085 + $0x38] sm:$0xf]
        %v2101 = vld [vmem:[%s2085 + $0x3c] sm:$0xf]
        %s2102 = scalar_lea.vmem %s6, 6
        %v2103 = vld [vmem:[%s2102] sm:$0x1]
        %v2105 = vlaneseq
        %v2106 = vshrl.u32 %v2105, 7
        %v2107 = vsub.s32 0, %v2106
        %v2108 = vrot.slane %v2103, %v2107
        %v2126 = vunpack.c.l.b16 %v2086
        %v2127 = vunpack.c.l.b16 %v2087
        %v2128 = vunpack.c.l.b16 %v2088
        %v2129 = vunpack.c.l.b16 %v2089
        %v2130 = vunpack.c.l.b16 %v2090
        %v2131 = vunpack.c.l.b16 %v2091
        %v2132 = vunpack.c.l.b16 %v2092
        %v2133 = vunpack.c.l.b16 %v2093
        %v2134 = vunpack.c.l.b16 %v2094
        %v2135 = vunpack.c.l.b16 %v2095
        %v2136 = vunpack.c.l.b16 %v2096
        %v2137 = vunpack.c.l.b16 %v2097
        %v2138 = vunpack.c.l.b16 %v2098
        %v2139 = vunpack.c.l.b16 %v2099
        %v2140 = vunpack.c.l.b16 %v2100
        %v2141 = vunpack.c.l.b16 %v2101
        %v2142 = vpack.c.b16 %v2127, %v2126
        %v2143 = vpack.c.b16 %v2129, %v2128
        %v2144 = vpack.c.b16 %v2131, %v2130
        %v2145 = vpack.c.b16 %v2133, %v2132
        %v2146 = vpack.c.b16 %v2135, %v2134
        %v2147 = vpack.c.b16 %v2137, %v2136
        %v2148 = vpack.c.b16 %v2139, %v2138
        %v2149 = vpack.c.b16 %v2141, %v2140
        %2158 = vmatprep.subr.bf16.mxu0 0
        %2159 = vmatpush1.bf16.msra.mxu0 %v2149
        %2160 = vmatprep.subr.bf16.mxu0 0
        %2161 = vmatpush1.bf16.msra.mxu0 %v2148
        %2162 = vmatprep.subr.bf16.mxu0 0
        %2163 = vmatpush1.bf16.msra.mxu0 %v2147
        %2164 = vmatprep.subr.bf16.mxu0 0
        %2165 = vmatpush1.bf16.msra.mxu0 %v2146
        %2166 = vmatprep.subr.bf16.mxu0 0
        %2167 = vmatpush1.bf16.msra.mxu0 %v2145
        %2168 = vmatprep.subr.bf16.mxu0 0
        %2169 = vmatpush1.bf16.msra.mxu0 %v2144
        %2170 = vmatprep.subr.bf16.mxu0 0
        %2171 = vmatpush1.bf16.msra.mxu0 %v2143
        %2172 = vmatprep.subr.bf16.mxu0 0
        %2173 = vmatpush1.bf16.msra.mxu0 %v2142
        %2174 = vmatprep.subr.bf16.mxu0 0
        %2175 = vmatpush2.bf16.msra.mxu0 0
        %2176 = vmatprep.subr.bf16.mxu0 0
        %2177 = vmatpush2.bf16.msra.mxu0 0
        %2178 = vmatprep.subr.bf16.mxu0 0
        %2179 = vmatpush2.bf16.msra.mxu0 0
        %2180 = vmatprep.subr.bf16.mxu0 0
        %2181 = vmatpush2.bf16.msra.mxu0 0
        %2182 = vmatprep.subr.bf16.mxu0 0
        %2183 = vmatpush2.bf16.msra.mxu0 0
        %2184 = vmatprep.subr.bf16.mxu0 0
        %2185 = vmatpush2.bf16.msra.mxu0 0
        %2186 = vmatprep.subr.bf16.mxu0 0
        %2187 = vmatpush2.bf16.msra.mxu0 0
        %2188 = vmatprep.subr.bf16.mxu0 0
        %2189 = vmatpush2.bf16.msra.mxu0 0
        %2190 = vmatprep.mubr.bf16.mxu0 0
        %2191 = vmatmul.mubr.bf16.gmra.mxu0 %v2081
        %v2192 = vpop.f32.mrf.mxu0
        %v2193 = vadd.f32 %v2108, %v2192
        %v2194 = vpop.f32.mrf.mxu0
        %v2195 = vpop.f32.mrf.mxu0
        %v2196 = vadd.f32 %v2108, %v2195
        %v2197 = vpop.f32.mrf.mxu0
        %2198 = vmatprep.mubr.bf16.mxu0 0
        %2199 = vmatmul.mubr.bf16.gmra.mxu0 %v2082
        %v2200 = vpop.f32.mrf.mxu0
        %v2201 = vadd.f32 %v2108, %v2200
        %v2202 = vpop.f32.mrf.mxu0
        %v2203 = vpop.f32.mrf.mxu0
        %v2204 = vadd.f32 %v2108, %v2203
        %v2205 = vpop.f32.mrf.mxu0
        %2206 = vmatprep.mubr.bf16.mxu0 0
        %2207 = vmatmul.mubr.bf16.gmra.mxu0 %v2083
        %v2208 = vpop.f32.mrf.mxu0
        %v2209 = vadd.f32 %v2108, %v2208
        %v2210 = vpop.f32.mrf.mxu0
        %v2211 = vpop.f32.mrf.mxu0
        %v2212 = vadd.f32 %v2108, %v2211
        %v2213 = vpop.f32.mrf.mxu0
        %2214 = vmatprep.mubr.bf16.mxu0 0
        %2215 = vmatmul.mubr.bf16.gmra.mxu0 %v2084
        %v2216 = vpop.f32.mrf.mxu0
        %v2217 = vadd.f32 %v2108, %v2216
        %v2218 = vpop.f32.mrf.mxu0
        %v2219 = vpop.f32.mrf.mxu0
        %v2220 = vadd.f32 %v2108, %v2219
        %v2221 = vpop.f32.mrf.mxu0
        %2222 = vdwg.mxu0
        %v2223 = vmax.f32 %v2193, 0.0
        %v2224 = vmax.f32 %v2196, 0.0
        %v2225 = vmax.f32 %v2201, 0.0
        %v2226 = vmax.f32 %v2204, 0.0
        %v2227 = vmax.f32 %v2209, 0.0
        %v2228 = vmax.f32 %v2212, 0.0
        %v2229 = vmax.f32 %v2217, 0.0
        %v2230 = vmax.f32 %v2220, 0.0
        %v2231 = vpack.c.bf16 %v2224, %v2223
        %v2232 = vpack.c.bf16 %v2226, %v2225
        %v2233 = vpack.c.bf16 %v2228, %v2227
        %v2234 = vpack.c.bf16 %v2230, %v2229
        %s2235 = scalar_lea.vmem %s5, 384
        %v2236 = vld [vmem:[%s2235] sm:$0xf]
        %v2237 = vld [vmem:[%s2235 + $0x4] sm:$0xf]
        %v2238 = vld [vmem:[%s2235 + $0x8] sm:$0xf]
        %v2239 = vld [vmem:[%s2235 + $0xc] sm:$0xf]
        %v2240 = vld [vmem:[%s2235 + $0x10] sm:$0xf]
        %v2241 = vld [vmem:[%s2235 + $0x14] sm:$0xf]
        %v2242 = vld [vmem:[%s2235 + $0x18] sm:$0xf]
        %v2243 = vld [vmem:[%s2235 + $0x1c] sm:$0xf]
        %v2244 = vld [vmem:[%s2235 + $0x20] sm:$0xf]
        %v2245 = vld [vmem:[%s2235 + $0x24] sm:$0xf]
        %v2246 = vld [vmem:[%s2235 + $0x28] sm:$0xf]
        %v2247 = vld [vmem:[%s2235 + $0x2c] sm:$0xf]
        %v2248 = vld [vmem:[%s2235 + $0x30] sm:$0xf]
        %v2249 = vld [vmem:[%s2235 + $0x34] sm:$0xf]
        %v2250 = vld [vmem:[%s2235 + $0x38] sm:$0xf]
        %v2251 = vld [vmem:[%s2235 + $0x3c] sm:$0xf]
        %s2252 = scalar_lea.vmem %s6, 7
        %v2253 = vld [vmem:[%s2252] sm:$0x1]
        %v2255 = vlaneseq
        %v2256 = vshrl.u32 %v2255, 7
        %v2257 = vsub.s32 0, %v2256
        %v2258 = vrot.slane %v2253, %v2257
        %v2276 = vunpack.c.l.b16 %v2236
        %v2277 = vunpack.c.l.b16 %v2237
        %v2278 = vunpack.c.l.b16 %v2238
        %v2279 = vunpack.c.l.b16 %v2239
        %v2280 = vunpack.c.l.b16 %v2240
        %v2281 = vunpack.c.l.b16 %v2241
        %v2282 = vunpack.c.l.b16 %v2242
        %v2283 = vunpack.c.l.b16 %v2243
        %v2284 = vunpack.c.l.b16 %v2244
        %v2285 = vunpack.c.l.b16 %v2245
        %v2286 = vunpack.c.l.b16 %v2246
        %v2287 = vunpack.c.l.b16 %v2247
        %v2288 = vunpack.c.l.b16 %v2248
        %v2289 = vunpack.c.l.b16 %v2249
        %v2290 = vunpack.c.l.b16 %v2250
        %v2291 = vunpack.c.l.b16 %v2251
        %v2292 = vpack.c.b16 %v2277, %v2276
        %v2293 = vpack.c.b16 %v2279, %v2278
        %v2294 = vpack.c.b16 %v2281, %v2280
        %v2295 = vpack.c.b16 %v2283, %v2282
        %v2296 = vpack.c.b16 %v2285, %v2284
        %v2297 = vpack.c.b16 %v2287, %v2286
        %v2298 = vpack.c.b16 %v2289, %v2288
        %v2299 = vpack.c.b16 %v2291, %v2290
        %2308 = vmatprep.subr.bf16.mxu0 0
        %2309 = vmatpush1.bf16.msra.mxu0 %v2299
        %2310 = vmatprep.subr.bf16.mxu0 0
        %2311 = vmatpush1.bf16.msra.mxu0 %v2298
        %2312 = vmatprep.subr.bf16.mxu0 0
        %2313 = vmatpush1.bf16.msra.mxu0 %v2297
        %2314 = vmatprep.subr.bf16.mxu0 0
        %2315 = vmatpush1.bf16.msra.mxu0 %v2296
        %2316 = vmatprep.subr.bf16.mxu0 0
        %2317 = vmatpush1.bf16.msra.mxu0 %v2295
        %2318 = vmatprep.subr.bf16.mxu0 0
        %2319 = vmatpush1.bf16.msra.mxu0 %v2294
        %2320 = vmatprep.subr.bf16.mxu0 0
        %2321 = vmatpush1.bf16.msra.mxu0 %v2293
        %2322 = vmatprep.subr.bf16.mxu0 0
        %2323 = vmatpush1.bf16.msra.mxu0 %v2292
        %2324 = vmatprep.subr.bf16.mxu0 0
        %2325 = vmatpush2.bf16.msra.mxu0 0
        %2326 = vmatprep.subr.bf16.mxu0 0
        %2327 = vmatpush2.bf16.msra.mxu0 0
        %2328 = vmatprep.subr.bf16.mxu0 0
        %2329 = vmatpush2.bf16.msra.mxu0 0
        %2330 = vmatprep.subr.bf16.mxu0 0
        %2331 = vmatpush2.bf16.msra.mxu0 0
        %2332 = vmatprep.subr.bf16.mxu0 0
        %2333 = vmatpush2.bf16.msra.mxu0 0
        %2334 = vmatprep.subr.bf16.mxu0 0
        %2335 = vmatpush2.bf16.msra.mxu0 0
        %2336 = vmatprep.subr.bf16.mxu0 0
        %2337 = vmatpush2.bf16.msra.mxu0 0
        %2338 = vmatprep.subr.bf16.mxu0 0
        %2339 = vmatpush2.bf16.msra.mxu0 0
        %2340 = vmatprep.mubr.bf16.mxu0 0
        %2341 = vmatmul.mubr.bf16.gmra.mxu0 %v2231
        %v2342 = vpop.f32.mrf.mxu0
        %v2343 = vadd.f32 %v2258, %v2342
        %v2344 = vpop.f32.mrf.mxu0
        %v2345 = vpop.f32.mrf.mxu0
        %v2346 = vadd.f32 %v2258, %v2345
        %v2347 = vpop.f32.mrf.mxu0
        %2348 = vmatprep.mubr.bf16.mxu0 0
        %2349 = vmatmul.mubr.bf16.gmra.mxu0 %v2232
        %v2350 = vpop.f32.mrf.mxu0
        %v2351 = vadd.f32 %v2258, %v2350
        %v2352 = vpop.f32.mrf.mxu0
        %v2353 = vpop.f32.mrf.mxu0
        %v2354 = vadd.f32 %v2258, %v2353
        %v2355 = vpop.f32.mrf.mxu0
        %2356 = vmatprep.mubr.bf16.mxu0 0
        %2357 = vmatmul.mubr.bf16.gmra.mxu0 %v2233
        %v2358 = vpop.f32.mrf.mxu0
        %v2359 = vadd.f32 %v2258, %v2358
        %v2360 = vpop.f32.mrf.mxu0
        %v2361 = vpop.f32.mrf.mxu0
        %v2362 = vadd.f32 %v2258, %v2361
        %v2363 = vpop.f32.mrf.mxu0
        %2364 = vmatprep.mubr.bf16.mxu0 0
        %2365 = vmatmul.mubr.bf16.gmra.mxu0 %v2234
        %v2366 = vpop.f32.mrf.mxu0
        %v2367 = vadd.f32 %v2258, %v2366
        %v2368 = vpop.f32.mrf.mxu0
        %v2369 = vpop.f32.mrf.mxu0
        %v2370 = vadd.f32 %v2258, %v2369
        %v2371 = vpop.f32.mrf.mxu0
        %2372 = vdwg.mxu0
        %v2373 = vmax.f32 %v2343, 0.0
        %v2374 = vmax.f32 %v2346, 0.0
        %v2375 = vmax.f32 %v2351, 0.0
        %v2376 = vmax.f32 %v2354, 0.0
        %v2377 = vmax.f32 %v2359, 0.0
        %v2378 = vmax.f32 %v2362, 0.0
        %v2379 = vmax.f32 %v2367, 0.0
        %v2380 = vmax.f32 %v2370, 0.0
        %v2381 = vpack.c.bf16 %v2374, %v2373
        %v2382 = vpack.c.bf16 %v2376, %v2375
        %v2383 = vpack.c.bf16 %v2378, %v2377
        %v2384 = vpack.c.bf16 %v2380, %v2379
        %s2385 = scalar_lea.vmem %s5, 448
        %v2386 = vld [vmem:[%s2385] sm:$0xf]
        %v2387 = vld [vmem:[%s2385 + $0x4] sm:$0xf]
        %v2388 = vld [vmem:[%s2385 + $0x8] sm:$0xf]
        %v2389 = vld [vmem:[%s2385 + $0xc] sm:$0xf]
        %v2390 = vld [vmem:[%s2385 + $0x10] sm:$0xf]
        %v2391 = vld [vmem:[%s2385 + $0x14] sm:$0xf]
        %v2392 = vld [vmem:[%s2385 + $0x18] sm:$0xf]
        %v2393 = vld [vmem:[%s2385 + $0x1c] sm:$0xf]
        %v2394 = vld [vmem:[%s2385 + $0x20] sm:$0xf]
        %v2395 = vld [vmem:[%s2385 + $0x24] sm:$0xf]
        %v2396 = vld [vmem:[%s2385 + $0x28] sm:$0xf]
        %v2397 = vld [vmem:[%s2385 + $0x2c] sm:$0xf]
        %v2398 = vld [vmem:[%s2385 + $0x30] sm:$0xf]
        %v2399 = vld [vmem:[%s2385 + $0x34] sm:$0xf]
        %v2400 = vld [vmem:[%s2385 + $0x38] sm:$0xf]
        %v2401 = vld [vmem:[%s2385 + $0x3c] sm:$0xf]
        %s2402 = scalar_lea.vmem %s6, 8
        %v2403 = vld [vmem:[%s2402] sm:$0x1]
        %v2405 = vlaneseq
        %v2406 = vshrl.u32 %v2405, 7
        %v2407 = vsub.s32 0, %v2406
        %v2408 = vrot.slane %v2403, %v2407
        %v2426 = vunpack.c.l.b16 %v2386
        %v2427 = vunpack.c.l.b16 %v2387
        %v2428 = vunpack.c.l.b16 %v2388
        %v2429 = vunpack.c.l.b16 %v2389
        %v2430 = vunpack.c.l.b16 %v2390
        %v2431 = vunpack.c.l.b16 %v2391
        %v2432 = vunpack.c.l.b16 %v2392
        %v2433 = vunpack.c.l.b16 %v2393
        %v2434 = vunpack.c.l.b16 %v2394
        %v2435 = vunpack.c.l.b16 %v2395
        %v2436 = vunpack.c.l.b16 %v2396
        %v2437 = vunpack.c.l.b16 %v2397
        %v2438 = vunpack.c.l.b16 %v2398
        %v2439 = vunpack.c.l.b16 %v2399
        %v2440 = vunpack.c.l.b16 %v2400
        %v2441 = vunpack.c.l.b16 %v2401
        %v2442 = vpack.c.b16 %v2427, %v2426
        %v2443 = vpack.c.b16 %v2429, %v2428
        %v2444 = vpack.c.b16 %v2431, %v2430
        %v2445 = vpack.c.b16 %v2433, %v2432
        %v2446 = vpack.c.b16 %v2435, %v2434
        %v2447 = vpack.c.b16 %v2437, %v2436
        %v2448 = vpack.c.b16 %v2439, %v2438
        %v2449 = vpack.c.b16 %v2441, %v2440
        %2458 = vmatprep.subr.bf16.mxu0 0
        %2459 = vmatpush1.bf16.msra.mxu0 %v2449
        %2460 = vmatprep.subr.bf16.mxu0 0
        %2461 = vmatpush1.bf16.msra.mxu0 %v2448
        %2462 = vmatprep.subr.bf16.mxu0 0
        %2463 = vmatpush1.bf16.msra.mxu0 %v2447
        %2464 = vmatprep.subr.bf16.mxu0 0
        %2465 = vmatpush1.bf16.msra.mxu0 %v2446
        %2466 = vmatprep.subr.bf16.mxu0 0
        %2467 = vmatpush1.bf16.msra.mxu0 %v2445
        %2468 = vmatprep.subr.bf16.mxu0 0
        %2469 = vmatpush1.bf16.msra.mxu0 %v2444
        %2470 = vmatprep.subr.bf16.mxu0 0
        %2471 = vmatpush1.bf16.msra.mxu0 %v2443
        %2472 = vmatprep.subr.bf16.mxu0 0
        %2473 = vmatpush1.bf16.msra.mxu0 %v2442
        %2474 = vmatprep.subr.bf16.mxu0 0
        %2475 = vmatpush2.bf16.msra.mxu0 0
        %2476 = vmatprep.subr.bf16.mxu0 0
        %2477 = vmatpush2.bf16.msra.mxu0 0
        %2478 = vmatprep.subr.bf16.mxu0 0
        %2479 = vmatpush2.bf16.msra.mxu0 0
        %2480 = vmatprep.subr.bf16.mxu0 0
        %2481 = vmatpush2.bf16.msra.mxu0 0
        %2482 = vmatprep.subr.bf16.mxu0 0
        %2483 = vmatpush2.bf16.msra.mxu0 0
        %2484 = vmatprep.subr.bf16.mxu0 0
        %2485 = vmatpush2.bf16.msra.mxu0 0
        %2486 = vmatprep.subr.bf16.mxu0 0
        %2487 = vmatpush2.bf16.msra.mxu0 0
        %2488 = vmatprep.subr.bf16.mxu0 0
        %2489 = vmatpush2.bf16.msra.mxu0 0
        %2490 = vmatprep.mubr.bf16.mxu0 0
        %2491 = vmatmul.mubr.bf16.gmra.mxu0 %v2381
        %v2492 = vpop.f32.mrf.mxu0
        %v2493 = vadd.f32 %v2408, %v2492
        %v2494 = vpop.f32.mrf.mxu0
        %v2495 = vpop.f32.mrf.mxu0
        %v2496 = vadd.f32 %v2408, %v2495
        %v2497 = vpop.f32.mrf.mxu0
        %2498 = vmatprep.mubr.bf16.mxu0 0
        %2499 = vmatmul.mubr.bf16.gmra.mxu0 %v2382
        %v2500 = vpop.f32.mrf.mxu0
        %v2501 = vadd.f32 %v2408, %v2500
        %v2502 = vpop.f32.mrf.mxu0
        %v2503 = vpop.f32.mrf.mxu0
        %v2504 = vadd.f32 %v2408, %v2503
        %v2505 = vpop.f32.mrf.mxu0
        %2506 = vmatprep.mubr.bf16.mxu0 0
        %2507 = vmatmul.mubr.bf16.gmra.mxu0 %v2383
        %v2508 = vpop.f32.mrf.mxu0
        %v2509 = vadd.f32 %v2408, %v2508
        %v2510 = vpop.f32.mrf.mxu0
        %v2511 = vpop.f32.mrf.mxu0
        %v2512 = vadd.f32 %v2408, %v2511
        %v2513 = vpop.f32.mrf.mxu0
        %2514 = vmatprep.mubr.bf16.mxu0 0
        %2515 = vmatmul.mubr.bf16.gmra.mxu0 %v2384
        %v2516 = vpop.f32.mrf.mxu0
        %v2517 = vadd.f32 %v2408, %v2516
        %v2518 = vpop.f32.mrf.mxu0
        %v2519 = vpop.f32.mrf.mxu0
        %v2520 = vadd.f32 %v2408, %v2519
        %v2521 = vpop.f32.mrf.mxu0
        %2522 = vdwg.mxu0
        %v2523 = vld [vmem:[%s329] sm:$0xff]
        %v2524 = vld [vmem:[%s329 + $0x8] sm:$0xff]
        %v2525 = vld [vmem:[%s329 + $0x10] sm:$0xff]
        %v2526 = vld [vmem:[%s329 + $0x18] sm:$0xff]
        %v2527 = vld [vmem:[%s329 + $0x20] sm:$0xff]
        %v2528 = vld [vmem:[%s329 + $0x28] sm:$0xff]
        %v2529 = vld [vmem:[%s329 + $0x30] sm:$0xff]
        %v2530 = vld [vmem:[%s329 + $0x38] sm:$0xff]
        %v2531 = vadd.f32 %v2523, %v2493
        %v2532 = vadd.f32 %v2524, %v2496
        %v2533 = vadd.f32 %v2525, %v2501
        %v2534 = vadd.f32 %v2526, %v2504
        %v2535 = vadd.f32 %v2527, %v2509
        %v2536 = vadd.f32 %v2528, %v2512
        %v2537 = vadd.f32 %v2529, %v2517
        %v2538 = vadd.f32 %v2530, %v2520
        %2539 = vst [vmem:[%s377] sm:$0xff] %v2531
        %2540 = vst [vmem:[%s377 + $0x8] sm:$0xff] %v2532
        %2541 = vst [vmem:[%s377 + $0x10] sm:$0xff] %v2533
        %2542 = vst [vmem:[%s377 + $0x18] sm:$0xff] %v2534
        %2543 = vst [vmem:[%s377 + $0x20] sm:$0xff] %v2535
        %2544 = vst [vmem:[%s377 + $0x28] sm:$0xff] %v2536
        %2545 = vst [vmem:[%s377 + $0x30] sm:$0xff] %v2537
        %2546 = vst [vmem:[%s377 + $0x38] sm:$0xff] %v2538
        %s2547 = sand.u32 %s207, 1
        %s2548 = scalar_lea.sflag [#allocation4], %s2547
        %s2549 = sand.u32 %s207, 1
        %s2550 = smul.addr %s2549, 64
        %s2551 = scalar_lea.vmem [#allocation7], %s2550
        // Predicated region
        $region57: #{tpu_custom_call.1} parent=47 // pred_check
          %p2552 = pneg %p217
        $region58: #{tpu_custom_call.1} parent=47 // pred_check_branch
          %2554 = sbr.rel (%p2552) target = $region60
        $region59: #{tpu_custom_call.1} parent=47 // pred_region
          %s2556 = ssub.s32 1024, 1024
          %2557 = vsyncadd %s2548, %s2556
          %s2558 = smul.addr %s27, 8
          %s2559 = smul.addr %s2558, 128
          %s2560 = scalar_lea.hbm %s7, %s2559
          %s2561 = sshll.u32 %s2551, 4
          %s2562 = int_to_ptr.vmem [resolvable:$true] %s2561
          %2567 = dma.vmem_to_hbm [thread:$0]  %s2562, 1024, %s2560, %s2548, 128, 128, 8
        $region60: #{tpu_custom_call.1} parent=47 // pred_fallthru
          _
      $region48: #{tpu_custom_call.1} parent=5 // pred_fallthru
        _
      %p2568 = scmp.le.s32.totalorder 2, %s22
      // Predicated region
      $region61: #{tpu_custom_call.1} parent=5 // pred_check
        %p2569 = pneg %p2568
      $region62: #{tpu_custom_call.1} parent=5 // pred_check_branch
        %2571 = sbr.rel (%p2569) target = $region64
      $region63: #{tpu_custom_call.1} parent=5 // pred_region
        %s2572 = ssub.s32 %s22, 2
        // Predicated region
        $region65: #{tpu_custom_call.1} parent=63 // pred_check
          %p2573 = pneg %p223
        $region66: #{tpu_custom_call.1} parent=63 // pred_check_branch
          %2575 = sbr.rel (%p2573) target = $region68
        $region67: #{tpu_custom_call.1} parent=63 // pred_region
          %s2576 = sand.u32 %s208, 1
          %s2577 = scalar_lea.sflag [#allocation4], %s2576
          %s2578 = sand.u32 %s208, 1
          %s2579 = smul.addr %s2578, 64
          %s2580 = scalar_lea.vmem [#allocation7], %s2579
          %2581 = dma.done %s2577, 1024
        $region68: #{tpu_custom_call.1} parent=63 // pred_fallthru
          _
      $region64: #{tpu_custom_call.1} parent=5 // pred_fallthru
        _
    $region6: #{tpu_custom_call.1} parent=1 // loop_footer
      %s26 = sadd.s32 1, %s22
    $region7: #{tpu_custom_call.1} parent=1 // loop_footer_branch
      %21 = sbr.rel target = $region3
    $region8: #{tpu_custom_call.1} parent=1 // loop_exit
      _
    %2582 = vsyncpa [#allocation3], 1
    %s2583 = scalar_lea.sflag [#allocation3], 1
    %2584 = vsyncpa %s2583, 1
    %2585 = vsyncpa [#allocation6], 1
    %s2586 = scalar_lea.sflag [#allocation6], 1
    %2587 = vsyncpa %s2586, 1
    %2588 = vsyncpa [#allocation4], 1
    %s2589 = scalar_lea.sflag [#allocation4], 1
    %2590 = vsyncpa %s2589, 1

</llo_original>
